<compile_context>
chip_gen: v7x
topology: tpu7x:2x2x1
jax: 0.10.0
libtpu: 0.0.40
codegen_flags: <defaults>
</compile_context>

<pallas_src>
import functools

import jax
import jax.numpy as jnp
from jax.experimental import pallas as pl
from jax.experimental.pallas import tpu as pltpu


def _vq_kernel(x_ref, e_ref,                       # inputs
               q_ref, idx_ref, counts_ref, sse_ref,  # outputs
               en_ref, e2_ref,                     # scratch
               *, use_l2: bool, num_embeddings: int):
    # Per-batch init (keyed on the inner/reduction axis so it is re-done per
    # core under a "parallel" batch axis): zero the per-batch accumulators and
    # hoist the codebook prep into scratch.
    @pl.when(pl.program_id(1) == 0)
    def _init():
        counts_ref[...] = jnp.zeros_like(counts_ref)
        sse_ref[...] = jnp.zeros_like(sse_ref)
        e = e_ref[...]                                          # (D, K) original
        if use_l2:
            nrm = jnp.maximum(
                jnp.sqrt(jnp.sum(e * e, axis=0, keepdims=True)), 1e-12)
            en_ref[...] = e / nrm                               # unit-norm codes
        else:
            en_ref[...] = e
            # ||e_k||^2 as a (K, 1) column via the MXU (no transposes needed).
            ones_col = jnp.ones((e.shape[0], 1), jnp.float32)
            e2_ref[...] = jax.lax.dot_general(
                e * e, ones_col, (((0,), (0,)), ((), ())),
                preferred_element_type=jnp.float32)

    x = x_ref[...]                                              # (D, rt) original
    D, rt = x.shape
    K = num_embeddings

    # Scores s[k, n] = sum_d en[d, k] * x[d, n] (MXU, transposed LHS natively).
    s = jax.lax.dot_general(en_ref[...], x, (((0,), (0,)), ((), ())),
                            preferred_element_type=jnp.float32)  # (K, rt)

    iota = jax.lax.broadcasted_iota(jnp.int32, (K, 1), 0)        # (K, 1) column
    if use_l2:
        # argmin ||x_n - e_n||^2 == argmax e_n^T x (||e_n||=1; ||x|| > 0 scale).
        best = jnp.max(s, axis=0, keepdims=True)                 # (1, rt)
        hit = s == best
    else:
        d = e2_ref[...] - 2.0 * s          # (K, rt), up to the +||x||^2 constant
        best = jnp.min(d, axis=0, keepdims=True)
        hit = d == best
    # First matching code (PyTorch argmin tie-break = first occurrence).
    idx = jnp.min(jnp.where(hit, iota, K), axis=0, keepdims=True)  # (1, rt)

    onehot = (iota == idx).astype(jnp.float32)                   # (K, rt)
    # Gather from the ORIGINAL table, producing q already lane-dense (D, rt).
    q = jnp.dot(e_ref[...], onehot, preferred_element_type=jnp.float32)

    q_ref[...] = q
    idx_ref[...] = idx.astype(jnp.int32)
    counts_ref[...] += jnp.sum(onehot, axis=1, keepdims=True)    # (K, 1)

    # Lane-dense partial SSE: add the 128-wide lane chunks (pure VPU adds),
    # never reduce to a scalar inside the kernel.
    diff2 = (x - q) ** 2                                         # (D, rt)
    part = diff2[:, 0:128]
    for c in range(1, rt // 128):
        part = part + diff2[:, c * 128:(c + 1) * 128]
    sse_ref[...] += part


def vector_quantizer_forward(x_nchw, embedding_table,
                             use_l2_normalization: bool, use_ema: bool,
                             *, max_row_tile: int = 2048):
    """Forward pass of VectorQuantizer (eval mode, no k-means / EMA update)."""
    B, C, H, W = x_nchw.shape
    D, K = embedding_table.shape
    assert C == D, "channel dim must equal embedding_dim"
    HW = H * W
    assert HW % 128 == 0, "H*W must be a multiple of 128 (no tail masking yet)"

    # Largest multiple-of-128 column tile that divides HW (capped).
    rt = 128
    for cand in (2048, 1024, 512, 256, 128):
        if cand <= max_row_tile and HW % cand == 0:
            rt = cand
            break

    x3 = x_nchw.reshape(B, D, HW)        # free reshape, no HBM transpose

    kernel = functools.partial(_vq_kernel,
                               use_l2=use_l2_normalization,
                               num_embeddings=K)

    q3, idx3, counts_b, sse_b = pl.pallas_call(
        kernel,
        out_shape=(
            jax.ShapeDtypeStruct((B, D, HW), jnp.float32),   # quantized (B,D,HW)
            jax.ShapeDtypeStruct((B, 1, HW), jnp.int32),     # encoding indices
            jax.ShapeDtypeStruct((B, K, 1), jnp.float32),    # per-batch counts
            jax.ShapeDtypeStruct((B, D, 128), jnp.float32),  # per-batch SSE part
        ),
        grid_spec=pltpu.PrefetchScalarGridSpec(
            num_scalar_prefetch=0,
            grid=(B, HW // rt),
            in_specs=[
                pl.BlockSpec((None, D, rt), lambda b, i: (b, 0, i)),  # x tile
                pl.BlockSpec((D, K), lambda b, i: (0, 0)),            # codebook
            ],
            out_specs=[
                pl.BlockSpec((None, D, rt), lambda b, i: (b, 0, i)),  # q (dense)
                pl.BlockSpec((None, 1, rt), lambda b, i: (b, 0, i)),  # indices
                pl.BlockSpec((None, K, 1), lambda b, i: (b, 0, 0)),   # counts
                pl.BlockSpec((None, D, 128), lambda b, i: (b, 0, 0)), # sse part
            ],
            scratch_shapes=[
                pltpu.VMEM((D, K), jnp.float32),   # (normalized) codebook
                pltpu.VMEM((K, 1), jnp.float32),   # ||E||^2 (use_l2=False path)
            ],
        ),
        compiler_params=pltpu.CompilerParams(
            dimension_semantics=("parallel", "arbitrary"),
            # Only needed on v5e (16 MiB default scoped VMEM) for large tiles;
            # stays well under v7x's 64 MiB physical VMEM.
            vmem_limit_bytes=(48 * 1024 * 1024) if rt >= 2048 else None,
        ),
    )(x3, embedding_table)

    # Glue: free reshapes + tiny host-side reductions.
    quantized_x = q3.reshape(B, D, H, W)
    encoding_indices = idx3.reshape(B, HW)

    sse = jnp.sum(sse_b)
    n_elems = jnp.float32(B * C * H * W)
    commitment_loss = sse / n_elems
    # dictionary_loss has the same forward value (detach only affects grads);
    # it is None when use_ema=True, matching the PyTorch module.
    dictionary_loss = None if use_ema else sse / n_elems

    counts = jnp.sum(counts_b, axis=(0, 2))            # (K,)
    probs = counts / jnp.sum(counts)
    entropy = -jnp.sum(probs * jnp.log(probs + 1e-10))

    # Note: the straight-through estimator (x + (q - x).detach()) has the same
    # forward value as quantized_x; gradients are out of scope here.
    return quantized_x, dictionary_loss, commitment_loss, entropy, encoding_indices


def _reference_forward(x_nchw, embedding_table, use_l2, use_ema):
    """Pure-JAX reference matching the PyTorch forward (eval mode)."""
    B, C, H, W = x_nchw.shape
    D, K = embedding_table.shape
    flat_x = jnp.transpose(x_nchw, (0, 2, 3, 1)).reshape(-1, D)
    e = embedding_table
    if use_l2:
        fx = flat_x / jnp.maximum(
            jnp.linalg.norm(flat_x, axis=1, keepdims=True), 1e-12)
        en = e / jnp.maximum(jnp.linalg.norm(e, axis=0, keepdims=True), 1e-12)
    else:
        fx, en = flat_x, e
    d = (jnp.sum(fx ** 2, 1, keepdims=True) - 2 * fx @ en
         + jnp.sum(en ** 2, 0, keepdims=True))
    idx = jnp.argmin(d, axis=1)
    q_flat = embedding_table.T[idx]
    q = jnp.transpose(q_flat.reshape(B, H, W, D), (0, 3, 1, 2))
    commitment = jnp.mean((x_nchw - q) ** 2)
    counts = jnp.bincount(idx, length=K).astype(jnp.float32)
    p = counts / counts.sum()
    entropy = -jnp.sum(p * jnp.log(p + 1e-10))
    return q, commitment, entropy, idx.reshape(B, -1)


if __name__ == "__main__":
    embedding_dim = 32
    num_embeddings = 128
    use_l2_normalization = True
    use_ema = False

    key = jax.random.PRNGKey(0)
    kx, ke = jax.random.split(key)
    # x: (batch=2, channels=embedding_dim=32, H=16, W=16)
    x = jax.random.normal(kx, (2, embedding_dim, 16, 16), dtype=jnp.float32)
    # embedding_table ~ Uniform(-0.5, 0.5), shape (embedding_dim, num_embeddings)
    embedding_table = jax.random.uniform(
        ke, (embedding_dim, num_embeddings), dtype=jnp.float32,
        minval=-0.5, maxval=0.5)

    out = vector_quantizer_forward(x, embedding_table,
                                   use_l2_normalization, use_ema)
    out = jax.block_until_ready(out)
    quantized_x, dict_loss, commit_loss, entropy, enc_idx = out

    # Cross-check against the pure-JAX reference.
    q_ref, c_ref, ent_ref, idx_ref = _reference_forward(
        x, embedding_table, use_l2_normalization, use_ema)
    assert jnp.allclose(quantized_x, q_ref, atol=1e-5)
    assert jnp.allclose(commit_loss, c_ref, atol=1e-5)
    assert jnp.allclose(entropy, ent_ref, atol=1e-5)
    assert jnp.array_equal(enc_idx.astype(jnp.int32), idx_ref.astype(jnp.int32))
    if not use_ema:
        assert jnp.allclose(dict_loss, c_ref, atol=1e-5)

    print("KERNEL_OK")
</pallas_src>

<mosaic_0001>
module attributes {stable_mosaic.version = 11 : i64} {
  func.func @_vq_kernel(%arg0: i32, %arg1: i32, %arg2: memref<1x32x256xf32, #tpu.memory_space<vmem>>, %arg3: memref<32x128xf32, #tpu.memory_space<vmem>>, %arg4: memref<1x32x256xf32, #tpu.memory_space<vmem>>, %arg5: memref<1x1x256xi32, #tpu.memory_space<vmem>>, %arg6: memref<1x128x1xf32, #tpu.memory_space<vmem>>, %arg7: memref<1x32x128xf32, #tpu.memory_space<vmem>>, %arg8: memref<32x128xf32, #tpu.memory_space<vmem>>, %arg9: memref<128x1xf32, #tpu.memory_space<vmem>>) attributes {dimension_semantics = [#tpu.dimension_semantics<parallel>, #tpu.dimension_semantics<arbitrary>], iteration_bounds = array<i64: 2, 1>, scalar_prefetch = 0 : i64, scratch_operands = 2 : i64, tpu.core_type = #tpu.core_type<tc>, window_params = [{transform_indices = @transform_0, window_bounds = array<i64: 1, 32, 256>}, {pipeline_mode = #tpu.pipeline_mode<synchronous>, transform_indices = @transform_1, window_bounds = array<i64: 32, 128>}, {transform_indices = @transform_2, window_bounds = array<i64: 1, 32, 256>}, {transform_indices = @transform_3, window_bounds = array<i64: 1, 1, 256>}, {transform_indices = @transform_4, window_bounds = array<i64: 1, 128, 1>}, {transform_indices = @transform_5, window_bounds = array<i64: 1, 32, 128>}]} {
    %c0_i32 = arith.constant 0 : i32
    %0 = arith.cmpi eq, %arg1, %c0_i32 : i32
    %1 = arith.extui %0 : i1 to i32
    %c0_i32_0 = arith.constant 0 : i32
    %2 = arith.cmpi ne, %1, %c0_i32_0 : i32
    scf.if %2 {
      %cst_29 = arith.constant 0.000000e+00 : f32
      %50 = vector.broadcast %cst_29 : f32 to vector<128x1xf32>
      %c0_30 = arith.constant 0 : index
      %c0_31 = arith.constant 0 : index
      %c0_32 = arith.constant 0 : index
      %51 = vector.load %arg6[%c0_30, %c0_31, %c0_32] : memref<1x128x1xf32, #tpu.memory_space<vmem>>, vector<1x128x1xf32>
      %52 = vector.shape_cast %51 : vector<1x128x1xf32> to vector<128x1xf32>
      %53 = vector.shape_cast %50 : vector<128x1xf32> to vector<1x128x1xf32>
      tpu.vector_store %arg6[%c0_30, %c0_31, %c0_32], %53 {strides = array<i32>} : memref<1x128x1xf32, #tpu.memory_space<vmem>>, vector<1x128x1xf32>,
      %cst_33 = arith.constant 0.000000e+00 : f32
      %54 = vector.broadcast %cst_33 : f32 to vector<32x128xf32>
      %c0_34 = arith.constant 0 : index
      %c0_35 = arith.constant 0 : index
      %c0_36 = arith.constant 0 : index
      %55 = vector.load %arg7[%c0_34, %c0_35, %c0_36] : memref<1x32x128xf32, #tpu.memory_space<vmem>>, vector<1x32x128xf32>
      %56 = vector.shape_cast %55 : vector<1x32x128xf32> to vector<32x128xf32>
      %57 = vector.shape_cast %54 : vector<32x128xf32> to vector<1x32x128xf32>
      tpu.vector_store %arg7[%c0_34, %c0_35, %c0_36], %57 {strides = array<i32>} : memref<1x32x128xf32, #tpu.memory_space<vmem>>, vector<1x32x128xf32>,
      %c0_37 = arith.constant 0 : index
      %c0_38 = arith.constant 0 : index
      %58 = vector.load %arg3[%c0_37, %c0_38] : memref<32x128xf32, #tpu.memory_space<vmem>>, vector<32x128xf32>
      %59 = arith.mulf %58, %58 : vector<32x128xf32>
      %cst_39 = arith.constant dense<0.000000e+00> : vector<128xf32>
      %60 = vector.multi_reduction <add>, %59, %cst_39 [0] : vector<32x128xf32> to vector<128xf32>
      %61 = vector.shape_cast %60 : vector<128xf32> to vector<1x128xf32>
      %62 = math.sqrt %61 : vector<1x128xf32>
      %cst_40 = arith.constant 9.99999996E-13 : f32
      %63 = vector.broadcast %cst_40 : f32 to vector<1x128xf32>
      %64 = arith.maximumf %62, %63 : vector<1x128xf32>
      %65 = vector.broadcast %64 : vector<1x128xf32> to vector<32x128xf32>
      %66 = arith.divf %58, %65 : vector<32x128xf32>
      %c0_41 = arith.constant 0 : index
      %c0_42 = arith.constant 0 : index
      %67 = vector.load %arg8[%c0_41, %c0_42] : memref<32x128xf32, #tpu.memory_space<vmem>>, vector<32x128xf32>
      tpu.vector_store %arg8[%c0_41, %c0_42], %66 {strides = array<i32>} : memref<32x128xf32, #tpu.memory_space<vmem>>, vector<32x128xf32>,
    } else {
    }
    %c0 = arith.constant 0 : index
    %c0_1 = arith.constant 0 : index
    %c0_2 = arith.constant 0 : index
    %3 = vector.load %arg2[%c0, %c0_1, %c0_2] : memref<1x32x256xf32, #tpu.memory_space<vmem>>, vector<1x32x256xf32>
    %4 = vector.shape_cast %3 : vector<1x32x256xf32> to vector<32x256xf32>
    %c0_3 = arith.constant 0 : index
    %c0_4 = arith.constant 0 : index
    %5 = vector.load %arg8[%c0_3, %c0_4] : memref<32x128xf32, #tpu.memory_space<vmem>>, vector<32x128xf32>
    %cst = arith.constant dense<0.000000e+00> : vector<128x256xf32>
    %6 = tpu.matmul %5, %4, %cst {dimension_numbers = #tpu.dot_dimension_numbers<[0], [0], [1], [1], [0, 1, 1, 1], [], []>} : vector<32x128xf32>, vector<32x256xf32>, vector<128x256xf32> -> vector<128x256xf32>
    %7 = tpu.iota {dimensions = array<i32: 0>} : vector<128x1xi32>
    %cst_5 = arith.constant dense<0xFF800000> : vector<256xf32>
    %8 = vector.multi_reduction <maximumf>, %6, %cst_5 [0] : vector<128x256xf32> to vector<256xf32>
    %9 = vector.shape_cast %8 : vector<256xf32> to vector<1x256xf32>
    %10 = vector.broadcast %9 : vector<1x256xf32> to vector<128x256xf32>
    %11 = arith.cmpf oeq, %6, %10 : vector<128x256xf32>
    %c128_i32 = arith.constant 128 : i32
    %12 = vector.shape_cast %7 : vector<128x1xi32> to vector<128x1xi32>
    %13 = vector.broadcast %12 : vector<128x1xi32> to vector<128x256xi32>
    %14 = vector.broadcast %c128_i32 : i32 to vector<128x256xi32>
    %15 = arith.select %11, %13, %14 : vector<128x256xi1>, vector<128x256xi32>
    %cst_6 = arith.constant dense<2147483647> : vector<256xi32>
    %16 = vector.multi_reduction <minsi>, %15, %cst_6 [0] : vector<128x256xi32> to vector<256xi32>
    %17 = vector.shape_cast %16 : vector<256xi32> to vector<1x256xi32>
    %18 = vector.broadcast %7 : vector<128x1xi32> to vector<128x256xi32>
    %19 = vector.broadcast %17 : vector<1x256xi32> to vector<128x256xi32>
    %20 = arith.cmpi eq, %18, %19 : vector<128x256xi32>
    %21 = arith.extui %20 : vector<128x256xi1> to vector<128x256xi32>
    %22 = arith.sitofp %21 : vector<128x256xi32> to vector<128x256xf32>
    %c0_7 = arith.constant 0 : index
    %c0_8 = arith.constant 0 : index
    %23 = vector.load %arg3[%c0_7, %c0_8] : memref<32x128xf32, #tpu.memory_space<vmem>>, vector<32x128xf32>
    %cst_9 = arith.constant dense<0.000000e+00> : vector<32x256xf32>
    %24 = tpu.matmul %23, %22, %cst_9 {dimension_numbers = #tpu.dot_dimension_numbers<[1], [0], [0], [1], [0, 0, 1, 1], [], []>} : vector<32x128xf32>, vector<128x256xf32>, vector<32x256xf32> -> vector<32x256xf32>
    %c0_10 = arith.constant 0 : index
    %c0_11 = arith.constant 0 : index
    %c0_12 = arith.constant 0 : index
    %25 = vector.load %arg4[%c0_10, %c0_11, %c0_12] : memref<1x32x256xf32, #tpu.memory_space<vmem>>, vector<1x32x256xf32>
    %26 = vector.shape_cast %25 : vector<1x32x256xf32> to vector<32x256xf32>
    %27 = vector.shape_cast %24 : vector<32x256xf32> to vector<1x32x256xf32>
    tpu.vector_store %arg4[%c0_10, %c0_11, %c0_12], %27 {strides = array<i32>} : memref<1x32x256xf32, #tpu.memory_space<vmem>>, vector<1x32x256xf32>,
    %c0_13 = arith.constant 0 : index
    %c0_14 = arith.constant 0 : index
    %c0_15 = arith.constant 0 : index
    %28 = vector.load %arg5[%c0_13, %c0_14, %c0_15] : memref<1x1x256xi32, #tpu.memory_space<vmem>>, vector<1x1x256xi32>
    %29 = vector.shape_cast %28 : vector<1x1x256xi32> to vector<1x256xi32>
    %30 = vector.shape_cast %17 : vector<1x256xi32> to vector<1x1x256xi32>
    tpu.vector_store %arg5[%c0_13, %c0_14, %c0_15], %30 {strides = array<i32>} : memref<1x1x256xi32, #tpu.memory_space<vmem>>, vector<1x1x256xi32>,
    %c0_16 = arith.constant 0 : index
    %c0_17 = arith.constant 0 : index
    %c0_18 = arith.constant 0 : index
    %31 = vector.load %arg6[%c0_16, %c0_17, %c0_18] : memref<1x128x1xf32, #tpu.memory_space<vmem>>, vector<1x128x1xf32>
    %32 = vector.shape_cast %31 : vector<1x128x1xf32> to vector<128x1xf32>
    %cst_19 = arith.constant dense<0.000000e+00> : vector<128xf32>
    %33 = vector.multi_reduction <add>, %22, %cst_19 [1] : vector<128x256xf32> to vector<128xf32>
    %34 = vector.shape_cast %33 : vector<128xf32> to vector<128x1xf32>
    %35 = arith.addf %32, %34 : vector<128x1xf32>
    %c0_20 = arith.constant 0 : index
    %c0_21 = arith.constant 0 : index
    %c0_22 = arith.constant 0 : index
    %36 = vector.load %arg6[%c0_20, %c0_21, %c0_22] : memref<1x128x1xf32, #tpu.memory_space<vmem>>, vector<1x128x1xf32>
    %37 = vector.shape_cast %36 : vector<1x128x1xf32> to vector<128x1xf32>
    %38 = vector.shape_cast %35 : vector<128x1xf32> to vector<1x128x1xf32>
    tpu.vector_store %arg6[%c0_20, %c0_21, %c0_22], %38 {strides = array<i32>} : memref<1x128x1xf32, #tpu.memory_space<vmem>>, vector<1x128x1xf32>,
    %39 = arith.subf %4, %24 : vector<32x256xf32>
    %40 = arith.mulf %39, %39 : vector<32x256xf32>
    %41 = vector.extract_strided_slice %40 {offsets = [0, 0], sizes = [32, 128], strides = [1, 1]} : vector<32x256xf32> to vector<32x128xf32>
    %42 = vector.extract_strided_slice %40 {offsets = [0, 128], sizes = [32, 128], strides = [1, 1]} : vector<32x256xf32> to vector<32x128xf32>
    %43 = arith.addf %41, %42 : vector<32x128xf32>
    %c0_23 = arith.constant 0 : index
    %c0_24 = arith.constant 0 : index
    %c0_25 = arith.constant 0 : index
    %44 = vector.load %arg7[%c0_23, %c0_24, %c0_25] : memref<1x32x128xf32, #tpu.memory_space<vmem>>, vector<1x32x128xf32>
    %45 = vector.shape_cast %44 : vector<1x32x128xf32> to vector<32x128xf32>
    %46 = arith.addf %45, %43 : vector<32x128xf32>
    %c0_26 = arith.constant 0 : index
    %c0_27 = arith.constant 0 : index
    %c0_28 = arith.constant 0 : index
    %47 = vector.load %arg7[%c0_26, %c0_27, %c0_28] : memref<1x32x128xf32, #tpu.memory_space<vmem>>, vector<1x32x128xf32>
    %48 = vector.shape_cast %47 : vector<1x32x128xf32> to vector<32x128xf32>
    %49 = vector.shape_cast %46 : vector<32x128xf32> to vector<1x32x128xf32>
    tpu.vector_store %arg7[%c0_26, %c0_27, %c0_28], %49 {strides = array<i32>} : memref<1x32x128xf32, #tpu.memory_space<vmem>>, vector<1x32x128xf32>,
    return
  }
  func.func @transform_0(%arg0: i32, %arg1: i32) -> (i32, i32, i32) {
    %c0_i32 = arith.constant 0 : i32
    %c0_i32_0 = arith.constant 0 : i32
    return %arg0, %c0_i32, %arg1 : i32, i32, i32
  }
  func.func @transform_1(%arg0: i32, %arg1: i32) -> (i32, i32) {
    %c0_i32 = arith.constant 0 : i32
    %c0_i32_0 = arith.constant 0 : i32
    %c0_i32_1 = arith.constant 0 : i32
    return %c0_i32, %c0_i32_0 : i32, i32
  }
  func.func @transform_2(%arg0: i32, %arg1: i32) -> (i32, i32, i32) {
    %c0_i32 = arith.constant 0 : i32
    %c0_i32_0 = arith.constant 0 : i32
    return %arg0, %c0_i32, %arg1 : i32, i32, i32
  }
  func.func @transform_3(%arg0: i32, %arg1: i32) -> (i32, i32, i32) {
    %c0_i32 = arith.constant 0 : i32
    %c0_i32_0 = arith.constant 0 : i32
    return %arg0, %c0_i32, %arg1 : i32, i32, i32
  }
  func.func @transform_4(%arg0: i32, %arg1: i32) -> (i32, i32, i32) {
    %c0_i32 = arith.constant 0 : i32
    %c0_i32_0 = arith.constant 0 : i32
    %c0_i32_1 = arith.constant 0 : i32
    return %arg0, %c0_i32, %c0_i32_0 : i32, i32, i32
  }
  func.func @transform_5(%arg0: i32, %arg1: i32) -> (i32, i32, i32) {
    %c0_i32 = arith.constant 0 : i32
    %c0_i32_0 = arith.constant 0 : i32
    %c0_i32_1 = arith.constant 0 : i32
    return %arg0, %c0_i32, %c0_i32_0 : i32, i32, i32
  }
}

</mosaic_0001>

<llo_original>
// kernel: tpu_custom_call.1
$region0: #{tpu_custom_call.1}
  #allocation0 [shape = 'u32[]', space=smem, size = 0x4, offset = 0x4, fixed_abs, tag = 'smem constant byte address 0x4 - core index']
  #allocation1 [shape = 'u32[144,128]{1,0:T(1,128)}', space=vmem, size = 0x12000, scoped, tag = 'internal scratch']
  #allocation2 [shape = 'f32[32,128]{1,0:T(8,128)}', space=vmem, size = 0x4000, scoped, tag = 'scratch operand']
  #allocation3 [shape = 'f32[128,1]{1,0:T(8,128)}', space=vmem, size = 0x10000, scoped, tag = 'scratch operand']
  %s0 = inlined_call_operand.hbm [shape: f32[2,32,256], index: 0, kind: input, shape index: {}]
  %s1 = inlined_call_operand.hbm [shape: f32[32,128], index: 1, kind: input, shape index: {}]
  %s2 = inlined_call_operand.hbm [shape: f32[2,32,256], index: 2, kind: output, shape index: {0}]
  %s3 = inlined_call_operand.hbm [shape: s32[2,1,256], index: 3, kind: output, shape index: {1}]
  %s4 = inlined_call_operand.vmem [shape: f32[2,128,1], index: 4, kind: output, shape index: {2}]
  %s5 = inlined_call_operand.hbm [shape: f32[2,32,128], index: 5, kind: output, shape index: {3}]
  %6 = xla_tuple %s2, %s3, %s4, %s5
  %s7 = sld [smem:[#allocation0]]
  $region77: #{tpu_custom_call.1} parent=0
    _
  %s9 = ssub.s32 1, %s7
  %s10 = scalar_select 0, %s9, %s7
  $region1: #{tpu_custom_call.1} parent=0
    #allocation4 [shape = 'u8[65536]{0}', space=vmem, size = 0x10000, scoped, tag = 'input window, operand 0']
    #allocation5 [shape = 's32[2]{0}', space=sflag, size = 0x8, scoped, tag = 'scoped memory for tpu_custom_call.1']
    #allocation6 [shape = 's32[2]{0}', space=sflag, size = 0x8, scoped, tag = 'scoped memory for tpu_custom_call.1']
    #allocation7 [shape = 'u8[16384]{0}', space=vmem, size = 0x4000, scoped, tag = 'input window, operand 1, single buffered']
    #allocation8 [shape = 's32[1]{0}', space=sflag, size = 0x4, scoped, tag = 'scoped memory for tpu_custom_call.1']
    #allocation9 [shape = 'u8[65536]{0}', space=vmem, size = 0x10000, scoped, tag = 'output window, operand 0']
    #allocation10 [shape = 'u8[2048]{0}', space=vmem, size = 0x800, scoped, tag = 'output window, operand 1']
    #allocation11 [shape = 's32[2]{0}', space=sflag, size = 0x8, scoped, tag = 'scoped memory for tpu_custom_call.1']
    #allocation12 [shape = 'u8[32768]{0}', space=vmem, size = 0x8000, scoped, tag = 'output window, operand 3']
    %11 = vsyncpa [#allocation5], 0
    %s12 = scalar_lea.sflag [#allocation5], 1
    %13 = vsyncpa %s12, 0
    %14 = vsyncpa [#allocation8], 0
    %15 = vsyncpa [#allocation6], 0
    %s16 = scalar_lea.sflag [#allocation6], 1
    %17 = vsyncpa %s16, 0
    %18 = vsyncpa [#allocation11], 0
    %s19 = scalar_lea.sflag [#allocation11], 1
    %20 = vsyncpa %s19, 0
    loop: start=0, step=1, limit=4
    $region2: #{tpu_custom_call.1} parent=1 // loop_pre_header
      _
    $region3: #{tpu_custom_call.1} parent=1 // loop_header
      %s22 = sphi 0, %s26
      %p23 = scmp.ge.s32.totalorder %s22, 4
      %s29 = sphi 0, %s41
      %s30 = sphi 0, %s37
      %s31 = sphi 0, %s29
      %s32 = sphi 0, %s30
      %s33 = sphi 0, %s31
      %s34 = sphi 0, %s32
      %s46 = sphi 0, %s48
      %s49 = sphi 0, %s46
      %s50 = sphi 0, %s49
      %s66 = sphi 0, %s50
      %s70 = sphi 0, %s70
      %s72 = sphi 0, %s70
      %s73 = sphi 0, %s72
      %s87 = sphi 0, %s73
      %s95 = sphi 0, %s97
      %s98 = sphi 0, %s95
      %s99 = sphi 0, %s98
      %s115 = sphi 0, %s99
      %s123 = sphi 0, %s125
      %s126 = sphi 0, %s123
      %s127 = sphi 0, %s126
      %s143 = sphi 0, %s127
      %s149 = sphi 0, %s151
      %s152 = sphi 0, %s149
      %s153 = sphi 0, %s152
      %s169 = sphi 0, %s153
      %s175 = sphi 0, %s177
      %s178 = sphi 0, %s175
      %s179 = sphi 0, %s178
      %s195 = sphi 0, %s179
    $region4: #{tpu_custom_call.1} parent=1 // loop_header_branch
      %25 = sbr.rel (%p23) target = $region8
    $region5: #{tpu_custom_call.1} parent=1 // loop_body
      %s27 = ssub.s32 %s22, 1
      %s28 = ssub.s32 %s22, 2
      %s35 = sadd.s32 1, %s30
      %p36 = scmp.ge.s32.totalorder %s35, 1
      %s37 = scalar_select %p36, 0, %s35
      %s38 = sadd.s32 1, %s29
      %s39 = scalar_select %p36, %s38, %s29
      %p40 = scmp.ge.s32.totalorder %s39, 2
      %s41 = scalar_select %p40, 0, %s39
      %s42 = ssub.s32 %s29, %s41
      %s43 = ssub.s32 %s30, %s37
      %s44 = sor.u32 %s42, %s43
      %p45 = scmp.eq.s32.totalorder %s44, 0
      %s47 = sadd.s32 %s46, 1
      %s48 = scalar_select %p45, %s46, %s47
      %p51 = pneg %p45
      %p52 = scmp.eq.s32.totalorder %s22, 1
      %p53 = por %p51, %p52
      %p54 = scmp.ne.s32.totalorder %s46, %s49
      %p55 = scmp.eq.s32.totalorder %s22, 0
      %p56 = por %p54, %p55
      %p57 = scmp.ne.s32.totalorder %s46, %s49
      %p58 = scmp.eq.s32.totalorder %s27, 1
      %p59 = por %p57, %p58
      %p60 = scmp.ne.s32.totalorder %s49, %s50
      %p61 = scmp.eq.s32.totalorder %s27, 0
      %p62 = por %p60, %p61
      %p63 = scmp.ne.s32.totalorder %s49, %s50
      %p64 = scmp.eq.s32.totalorder %s28, 1
      %p65 = por %p63, %p64
      %p67 = scmp.ne.s32.totalorder %s50, %s66
      %p68 = scmp.eq.s32.totalorder %s28, 0
      %p69 = por %p67, %p68
      %s71 = sadd.s32 %s70, 1
      %p74 = scmp.eq.s32.totalorder %s22, 1
      %p75 = scmp.ne.s32.totalorder %s70, %s72
      %p76 = scmp.eq.s32.totalorder %s22, 0
      %p77 = por %p75, %p76
      %p78 = scmp.ne.s32.totalorder %s70, %s72
      %p79 = scmp.eq.s32.totalorder %s27, 1
      %p80 = por %p78, %p79
      %p81 = scmp.ne.s32.totalorder %s72, %s73
      %p82 = scmp.eq.s32.totalorder %s27, 0
      %p83 = por %p81, %p82
      %p84 = scmp.ne.s32.totalorder %s72, %s73
      %p85 = scmp.eq.s32.totalorder %s28, 1
      %p86 = por %p84, %p85
      %p88 = scmp.ne.s32.totalorder %s73, %s87
      %p89 = scmp.eq.s32.totalorder %s28, 0
      %p90 = por %p88, %p89
      %s91 = ssub.s32 %s29, %s41
      %s92 = ssub.s32 %s30, %s37
      %s93 = sor.u32 %s91, %s92
      %p94 = scmp.eq.s32.totalorder %s93, 0
      %s96 = sadd.s32 %s95, 1
      %s97 = scalar_select %p94, %s95, %s96
      %p100 = pneg %p94
      %p101 = scmp.eq.s32.totalorder %s22, 1
      %p102 = por %p100, %p101
      %p103 = scmp.ne.s32.totalorder %s95, %s98
      %p104 = scmp.eq.s32.totalorder %s22, 0
      %p105 = por %p103, %p104
      %p106 = scmp.ne.s32.totalorder %s95, %s98
      %p107 = scmp.eq.s32.totalorder %s27, 1
      %p108 = por %p106, %p107
      %p109 = scmp.ne.s32.totalorder %s98, %s99
      %p110 = scmp.eq.s32.totalorder %s27, 0
      %p111 = por %p109, %p110
      %p112 = scmp.ne.s32.totalorder %s98, %s99
      %p113 = scmp.eq.s32.totalorder %s28, 1
      %p114 = por %p112, %p113
      %p116 = scmp.ne.s32.totalorder %s99, %s115
      %p117 = scmp.eq.s32.totalorder %s28, 0
      %p118 = por %p116, %p117
      %s119 = ssub.s32 %s29, %s41
      %s120 = ssub.s32 %s30, %s37
      %s121 = sor.u32 %s119, %s120
      %p122 = scmp.eq.s32.totalorder %s121, 0
      %s124 = sadd.s32 %s123, 1
      %s125 = scalar_select %p122, %s123, %s124
      %p128 = pneg %p122
      %p129 = scmp.eq.s32.totalorder %s22, 1
      %p130 = por %p128, %p129
      %p131 = scmp.ne.s32.totalorder %s123, %s126
      %p132 = scmp.eq.s32.totalorder %s22, 0
      %p133 = por %p131, %p132
      %p134 = scmp.ne.s32.totalorder %s123, %s126
      %p135 = scmp.eq.s32.totalorder %s27, 1
      %p136 = por %p134, %p135
      %p137 = scmp.ne.s32.totalorder %s126, %s127
      %p138 = scmp.eq.s32.totalorder %s27, 0
      %p139 = por %p137, %p138
      %p140 = scmp.ne.s32.totalorder %s126, %s127
      %p141 = scmp.eq.s32.totalorder %s28, 1
      %p142 = por %p140, %p141
      %p144 = scmp.ne.s32.totalorder %s127, %s143
      %p145 = scmp.eq.s32.totalorder %s28, 0
      %p146 = por %p144, %p145
      %s147 = ssub.s32 %s29, %s41
      %p148 = scmp.eq.s32.totalorder %s147, 0
      %s150 = sadd.s32 %s149, 1
      %s151 = scalar_select %p148, %s149, %s150
      %p154 = pneg %p148
      %p155 = scmp.eq.s32.totalorder %s22, 1
      %p156 = por %p154, %p155
      %p157 = scmp.ne.s32.totalorder %s149, %s152
      %p158 = scmp.eq.s32.totalorder %s22, 0
      %p159 = por %p157, %p158
      %p160 = scmp.ne.s32.totalorder %s149, %s152
      %p161 = scmp.eq.s32.totalorder %s27, 1
      %p162 = por %p160, %p161
      %p163 = scmp.ne.s32.totalorder %s152, %s153
      %p164 = scmp.eq.s32.totalorder %s27, 0
      %p165 = por %p163, %p164
      %p166 = scmp.ne.s32.totalorder %s152, %s153
      %p167 = scmp.eq.s32.totalorder %s28, 1
      %p168 = por %p166, %p167
      %p170 = scmp.ne.s32.totalorder %s153, %s169
      %p171 = scmp.eq.s32.totalorder %s28, 0
      %p172 = por %p170, %p171
      %s173 = ssub.s32 %s29, %s41
      %p174 = scmp.eq.s32.totalorder %s173, 0
      %s176 = sadd.s32 %s175, 1
      %s177 = scalar_select %p174, %s175, %s176
      %p180 = pneg %p174
      %p181 = scmp.eq.s32.totalorder %s22, 1
      %p182 = por %p180, %p181
      %p183 = scmp.ne.s32.totalorder %s175, %s178
      %p184 = scmp.eq.s32.totalorder %s22, 0
      %p185 = por %p183, %p184
      %p186 = scmp.ne.s32.totalorder %s175, %s178
      %p187 = scmp.eq.s32.totalorder %s27, 1
      %p188 = por %p186, %p187
      %p189 = scmp.ne.s32.totalorder %s178, %s179
      %p190 = scmp.eq.s32.totalorder %s27, 0
      %p191 = por %p189, %p190
      %p192 = scmp.ne.s32.totalorder %s178, %s179
      %p193 = scmp.eq.s32.totalorder %s28, 1
      %p194 = por %p192, %p193
      %p196 = scmp.ne.s32.totalorder %s179, %s195
      %p197 = scmp.eq.s32.totalorder %s28, 0
      %p198 = por %p196, %p197
      %p199 = scmp.le.s32.totalorder 1, %s22
      %p200 = scmp.lt.s32.totalorder %s22, 3
      %p201 = pnand %p199, %p200
      %p202 = pneg %p201
      // Predicated region
      $region9: #{tpu_custom_call.1} parent=5 // pred_check
        _
      $region10: #{tpu_custom_call.1} parent=5 // pred_check_branch
        %204 = sbr.rel (%p201) target = $region12
      $region11: #{tpu_custom_call.1} parent=5 // pred_region
        %s205 = ssub.s32 %s22, 1
        // Predicated region
        $region13: #{tpu_custom_call.1} parent=11 // pred_check
          %p206 = pneg %p83
        $region14: #{tpu_custom_call.1} parent=11 // pred_check_branch
          %208 = sbr.rel (%p206) target = $region16
        $region15: #{tpu_custom_call.1} parent=11 // pred_region
          %s210 = ssub.s32 512, 512
          %211 = vsyncadd [#allocation8], %s210
          %s212 = sshll.u32 [#allocation7], 4
          %s213 = int_to_ptr.vmem [resolvable:$true] %s212
          %218 = dma.hbm_to_vmem [thread:$0]  %s1, 512, %s213, [#allocation8], 128, 128, 8
        $region16: #{tpu_custom_call.1} parent=11 // pred_fallthru
          _
      $region12: #{tpu_custom_call.1} parent=5 // pred_fallthru
        _
      %p219 = scmp.lt.s32.totalorder %s22, 2
      // Predicated region
      $region17: #{tpu_custom_call.1} parent=5 // pred_check
        %p220 = pneg %p219
      $region18: #{tpu_custom_call.1} parent=5 // pred_check_branch
        %222 = sbr.rel (%p220) target = $region20
      $region19: #{tpu_custom_call.1} parent=5 // pred_region
        // Predicated region
        $region21: #{tpu_custom_call.1} parent=19 // pred_check
          %p223 = pneg %p56
        $region22: #{tpu_custom_call.1} parent=19 // pred_check_branch
          %225 = sbr.rel (%p223) target = $region24
        $region23: #{tpu_custom_call.1} parent=19 // pred_region
          %s226 = sand.u32 %s46, 1
          %s227 = scalar_lea.sflag [#allocation5], %s226
          %s228 = sand.u32 %s46, 1
          %s229 = smul.addr %s228, 64
          %s230 = scalar_lea.vmem [#allocation4], %s229
          %s231 = smul.u32 2, %s30
          %s233 = ssub.s32 1024, 1024
          %234 = vsyncadd %s227, %s233
          %s235 = smul.addr %s29, 8
          %s236 = sadd.s32 %s231, %s235
          %s237 = smul.addr %s236, 128
          %s238 = scalar_lea.hbm %s0, %s237
          %s239 = sshll.u32 %s230, 4
          %s240 = int_to_ptr.vmem [resolvable:$true] %s239
          %245 = dma.hbm_to_vmem [thread:$0]  %s238, 1024, %s240, %s227, 256, 256, 16
        $region24: #{tpu_custom_call.1} parent=19 // pred_fallthru
          _
      $region20: #{tpu_custom_call.1} parent=5 // pred_fallthru
        _
      %p246 = scmp.le.s32.totalorder 1, %s22
      %p247 = scmp.lt.s32.totalorder %s22, 3
      %p248 = pnand %p246, %p247
      %p249 = pneg %p248
      // Predicated region
      $region25: #{tpu_custom_call.1} parent=5 // pred_check
        _
      $region26: #{tpu_custom_call.1} parent=5 // pred_check_branch
        %251 = sbr.rel (%p248) target = $region28
      $region27: #{tpu_custom_call.1} parent=5 // pred_region
        %s252 = ssub.s32 %s22, 1
        %s253 = sand.u32 %s49, 1
        %s254 = scalar_lea.sflag [#allocation5], %s253
        %s255 = sand.u32 %s49, 1
        %s256 = smul.addr %s255, 64
        %s257 = scalar_lea.vmem [#allocation4], %s256
        // Predicated region
        $region29: #{tpu_custom_call.1} parent=27 // pred_check
          %p258 = pneg %p62
        $region30: #{tpu_custom_call.1} parent=27 // pred_check_branch
          %260 = sbr.rel (%p258) target = $region32
        $region31: #{tpu_custom_call.1} parent=27 // pred_region
          %261 = dma.done %s254, 1024
        $region32: #{tpu_custom_call.1} parent=27 // pred_fallthru
          _
        // Predicated region
        $region33: #{tpu_custom_call.1} parent=27 // pred_check
          %p262 = pneg %p83
        $region34: #{tpu_custom_call.1} parent=27 // pred_check_branch
          %264 = sbr.rel (%p262) target = $region36
        $region35: #{tpu_custom_call.1} parent=27 // pred_region
          %265 = dma.done [#allocation8], 512
        $region36: #{tpu_custom_call.1} parent=27 // pred_fallthru
          _
        %s266 = sand.u32 %s49, 1
        %s267 = scalar_lea.sflag [#allocation5], %s266
        %s268 = sand.u32 %s49, 1
        %s269 = smul.addr %s268, 64
        %s270 = scalar_lea.vmem [#allocation4], %s269
        %p271 = pneg %p62
        %p272 = pneg %p59
        %p273 = pneg %p83
        %p274 = pneg %p80
        %p275 = pneg %p111
        %p276 = pneg %p108
        %s277 = sand.u32 %s98, 1
        %s278 = scalar_lea.sflag [#allocation6], %s277
        %s279 = sand.u32 %s98, 1
        %s280 = smul.addr %s279, 64
        %s281 = scalar_lea.vmem [#allocation9], %s280
        %p282 = pneg %p139
        %p283 = pneg %p136
        %s284 = sand.u32 %s27, 1
        %s285 = scalar_lea.sflag [#allocation11], %s284
        %s286 = sand.u32 %s126, 1
        %s287 = smul.addr %s286, 2
        %s288 = scalar_lea.vmem [#allocation10], %s287
        %p289 = pneg %p165
        %p290 = pneg %p162
        %p291 = scmp.lt.s32.totalorder %s31, 1
        %s292 = scalar_select %p291, %s31, 1
        %s293 = smul.addr %s292, 16
        %s294 = smul.addr %s293, 8
        %s295 = scalar_lea.vmem %s4, %s294
        %p296 = pneg %p191
        %p297 = pneg %p188
        %s298 = sand.u32 %s27, 1
        %s299 = scalar_lea.sflag [#allocation11], %s298
        %s300 = sand.u32 %s178, 1
        %s301 = smul.addr %s300, 32
        %s302 = scalar_lea.vmem [#allocation12], %s301
        %s303 = smul.u32 2, %s32
        %s304 = smul.u32 2, %s32
        %s305 = smul.u32 2, %s32
        %p306 = scmp.lt.s32.totalorder %s31, 1
        %s307 = scalar_select %p306, %s31, 1
        %s308 = smul.addr %s307, 16
        %s309 = smul.addr %s308, 8
        %s310 = scalar_lea.vmem %s4, %s309
        %p311 = scmp.eq.s32.totalorder %s32, 0
        // Predicated region
        $region37: #{tpu_custom_call.1} parent=27 // pred_check
          %p312 = pneg %p311
        $region38: #{tpu_custom_call.1} parent=27 // pred_check_branch
          %314 = sbr.rel (%p312) target = $region40
        $region39: #{tpu_custom_call.1} parent=27 // pred_region
          %vm315 = vcmask 7168
          %316 = vst.msk [vmem:[%s310] sm:$0xff] %vm315, 0.0
          %317 = vst.msk [vmem:[%s310 + $0x8] sm:$0xff] %vm315, 0.0
          %318 = vst.msk [vmem:[%s310 + $0x10] sm:$0xff] %vm315, 0.0
          %319 = vst.msk [vmem:[%s310 + $0x18] sm:$0xff] %vm315, 0.0
          %320 = vst.msk [vmem:[%s310 + $0x20] sm:$0xff] %vm315, 0.0
          %321 = vst.msk [vmem:[%s310 + $0x28] sm:$0xff] %vm315, 0.0
          %322 = vst.msk [vmem:[%s310 + $0x30] sm:$0xff] %vm315, 0.0
          %323 = vst.msk [vmem:[%s310 + $0x38] sm:$0xff] %vm315, 0.0
          %324 = vst.msk [vmem:[%s310 + $0x40] sm:$0xff] %vm315, 0.0
          %325 = vst.msk [vmem:[%s310 + $0x48] sm:$0xff] %vm315, 0.0
          %326 = vst.msk [vmem:[%s310 + $0x50] sm:$0xff] %vm315, 0.0
          %327 = vst.msk [vmem:[%s310 + $0x58] sm:$0xff] %vm315, 0.0
          %328 = vst.msk [vmem:[%s310 + $0x60] sm:$0xff] %vm315, 0.0
          %329 = vst.msk [vmem:[%s310 + $0x68] sm:$0xff] %vm315, 0.0
          %330 = vst.msk [vmem:[%s310 + $0x70] sm:$0xff] %vm315, 0.0
          %331 = vst.msk [vmem:[%s310 + $0x78] sm:$0xff] %vm315, 0.0
          %332 = vst [vmem:[%s302] sm:$0xff] 0.0
          %333 = vst [vmem:[%s302 + $0x8] sm:$0xff] 0.0
          %334 = vst [vmem:[%s302 + $0x10] sm:$0xff] 0.0
          %335 = vst [vmem:[%s302 + $0x18] sm:$0xff] 0.0
          %v336 = vld [vmem:[#allocation7] sm:$0xff]
          %v337 = vld [vmem:[#allocation7 + $0x8] sm:$0xff]
          %v338 = vld [vmem:[#allocation7 + $0x10] sm:$0xff]
          %v339 = vld [vmem:[#allocation7 + $0x18] sm:$0xff]
          %v340 = vmul.f32 %v336, %v336
          %v341 = vmul.f32 %v337, %v337
          %v342 = vmul.f32 %v338, %v338
          %v343 = vmul.f32 %v339, %v339
          %v344 = vadd.f32 %v340, %v341
          %v345 = vadd.f32 %v344, %v342
          %v346 = vadd.f32 %v345, %v343
          %v347 = vrot.slane %v346, 4
          %v348 = vadd.f32 %v346, %v347
          %v349 = vrot.slane %v348, 2
          %v350 = vadd.f32 %v348, %v349
          %v351 = vrot.slane %v350, 1
          %v352 = vadd.f32 %v350, %v351
          %v353 = vrsqrt.pop %v352
          %v354 = vmul.f32 %v352, %v353
          %vm355 = vcmp.eq.f32.partialorder %v352, inf
          %v356 = vsel %vm355, %v352, %v354
          %vm357 = vcmp.eq.f32.partialorder %v352, 0.0
          %v358 = vand.u32 %v352, 2147483648
          %v359 = vsel %vm357, %v358, %v356
          %v360 = vmax.f32 %v359, 1e-12
          %v361 = vrcp.pop %v360
          %v362 = vmul.f32 %v336, %v361
          %v363 = vmul.f32 %v337, %v361
          %v364 = vmul.f32 %v338, %v361
          %v365 = vmul.f32 %v339, %v361
          %366 = vst [vmem:[#allocation2] sm:$0xff] %v362
          %367 = vst [vmem:[#allocation2 + $0x8] sm:$0xff] %v363
          %368 = vst [vmem:[#allocation2 + $0x10] sm:$0xff] %v364
          %369 = vst [vmem:[#allocation2 + $0x18] sm:$0xff] %v365
        $region40: #{tpu_custom_call.1} parent=27 // pred_fallthru
          _
        %v370 = vld [vmem:[%s257] sm:$0xff]
        %v371 = vld [vmem:[%s257 + $0x8] sm:$0xff]
        %v372 = vld [vmem:[%s257 + $0x10] sm:$0xff]
        %v373 = vld [vmem:[%s257 + $0x18] sm:$0xff]
        %v374 = vld [vmem:[%s257 + $0x20] sm:$0xff]
        %v375 = vld [vmem:[%s257 + $0x28] sm:$0xff]
        %v376 = vld [vmem:[%s257 + $0x30] sm:$0xff]
        %v377 = vld [vmem:[%s257 + $0x38] sm:$0xff]
        %v378 = vld [vmem:[#allocation2] sm:$0xff]
        %v379 = vld [vmem:[#allocation2 + $0x8] sm:$0xff]
        %v380 = vld [vmem:[#allocation2 + $0x10] sm:$0xff]
        %v381 = vld [vmem:[#allocation2 + $0x18] sm:$0xff]
        %382 = vxpose.xlu0.b32.start [1/16] %v378, 128
        %383 = vxpose.xlu0.b32.cont [2/16] %v379, 128
        %384 = vxpose.xlu0.b32.cont [3/16] %v380, 128
        %385 = vxpose.xlu0.b32.cont [4/16] %v381, 128
        %386 = vxpose.xlu0.b32.cont [5/16] 0.0, 128
        %387 = vxpose.xlu0.b32.cont [6/16] 0.0, 128
        %388 = vxpose.xlu0.b32.cont [7/16] 0.0, 128
        %389 = vxpose.xlu0.b32.cont [8/16] 0.0, 128
        %390 = vxpose.xlu0.b32.cont [9/16] 0.0, 128
        %391 = vxpose.xlu0.b32.cont [10/16] 0.0, 128
        %392 = vxpose.xlu0.b32.cont [11/16] 0.0, 128
        %393 = vxpose.xlu0.b32.cont [12/16] 0.0, 128
        %394 = vxpose.xlu0.b32.cont [13/16] 0.0, 128
        %395 = vxpose.xlu0.b32.cont [14/16] 0.0, 128
        %396 = vxpose.xlu0.b32.cont [15/16] 0.0, 128
        %397 = vxpose.xlu0.b32.end [16/16] 0.0, 128
        %v398 = vpop.trf.xlu0
        %v399 = vpop.trf.xlu0
        %v400 = vpop.trf.xlu0
        %v401 = vpop.trf.xlu0
        %v402 = vpop.trf.xlu0
        %v403 = vpop.trf.xlu0
        %v404 = vpop.trf.xlu0
        %v405 = vpop.trf.xlu0
        %v406 = vpop.trf.xlu0
        %v407 = vpop.trf.xlu0
        %v408 = vpop.trf.xlu0
        %v409 = vpop.trf.xlu0
        %v410 = vpop.trf.xlu0
        %v411 = vpop.trf.xlu0
        %v412 = vpop.trf.xlu0
        %v413 = vpop.trf.xlu0
        %vm414 = vcmask 261120
        %v416 = vsel %vm414, %v398, 0
        %v419 = vsel %vm414, %v399, 0
        %v422 = vsel %vm414, %v400, 0
        %v425 = vsel %vm414, %v401, 0
        %v428 = vsel %vm414, %v402, 0
        %v431 = vsel %vm414, %v403, 0
        %v434 = vsel %vm414, %v404, 0
        %v437 = vsel %vm414, %v405, 0
        %v440 = vsel %vm414, %v406, 0
        %v443 = vsel %vm414, %v407, 0
        %v446 = vsel %vm414, %v408, 0
        %v449 = vsel %vm414, %v409, 0
        %v452 = vsel %vm414, %v410, 0
        %v455 = vsel %vm414, %v411, 0
        %v458 = vsel %vm414, %v412, 0
        %v461 = vsel %vm414, %v413, 0
        %463 = vmatprep.subr.mxu0 %v371
        %464 = vmatpush1.msra.mxu0 %v370
        %465 = vmatprep.subr.mxu0 %v373
        %466 = vmatpush1.msra.mxu0 %v372
        %467 = vmatprep.subr.mxu0 %v375
        %468 = vmatpush1.msra.mxu0 %v374
        %469 = vmatprep.subr.mxu0 %v377
        %470 = vmatpush1.msra.mxu0 %v376
        %471 = vmatprep.subr.mxu0 0.0
        %472 = vmatpush1.msra.mxu0 0.0
        %473 = vmatprep.subr.mxu0 0.0
        %474 = vmatpush1.msra.mxu0 0.0
        %475 = vmatprep.subr.mxu0 0.0
        %476 = vmatpush1.msra.mxu0 0.0
        %477 = vmatprep.subr.mxu0 0.0
        %478 = vmatpush1.msra.mxu0 0.0
        %479 = vmatprep.subr.mxu0 0.0
        %480 = vmatpush1.msra.mxu0 0.0
        %481 = vmatprep.subr.mxu0 0.0
        %482 = vmatpush1.msra.mxu0 0.0
        %483 = vmatprep.subr.mxu0 0.0
        %484 = vmatpush1.msra.mxu0 0.0
        %485 = vmatprep.subr.mxu0 0.0
        %486 = vmatpush1.msra.mxu0 0.0
        %487 = vmatprep.subr.mxu0 0.0
        %488 = vmatpush1.msra.mxu0 0.0
        %489 = vmatprep.subr.mxu0 0.0
        %490 = vmatpush1.msra.mxu0 0.0
        %491 = vmatprep.subr.mxu0 0.0
        %492 = vmatpush1.msra.mxu0 0.0
        %493 = vmatprep.subr.mxu0 0.0
        %494 = vmatpush1.msra.mxu0 0.0
        %495 = vmatprep.subr.mxu0 0.0
        %496 = vmatpush1.msra.mxu0 0.0
        %497 = vmatprep.subr.mxu0 0.0
        %498 = vmatpush1.msra.mxu0 0.0
        %499 = vmatprep.subr.mxu0 0.0
        %500 = vmatpush1.msra.mxu0 0.0
        %501 = vmatprep.subr.mxu0 0.0
        %502 = vmatpush1.msra.mxu0 0.0
        %503 = vmatprep.subr.mxu0 0.0
        %504 = vmatpush1.msra.mxu0 0.0
        %505 = vmatprep.subr.mxu0 0.0
        %506 = vmatpush1.msra.mxu0 0.0
        %507 = vmatprep.subr.mxu0 0.0
        %508 = vmatpush1.msra.mxu0 0.0
        %509 = vmatprep.subr.mxu0 0.0
        %510 = vmatpush1.msra.mxu0 0.0
        %511 = vmatprep.subr.mxu0 0.0
        %512 = vmatpush1.msra.mxu0 0.0
        %513 = vmatprep.subr.mxu0 0.0
        %514 = vmatpush1.msra.mxu0 0.0
        %515 = vmatprep.subr.mxu0 0.0
        %516 = vmatpush1.msra.mxu0 0.0
        %517 = vmatprep.subr.mxu0 0.0
        %518 = vmatpush1.msra.mxu0 0.0
        %519 = vmatprep.subr.mxu0 0.0
        %520 = vmatpush1.msra.mxu0 0.0
        %521 = vmatprep.subr.mxu0 0.0
        %522 = vmatpush1.msra.mxu0 0.0
        %523 = vmatprep.subr.mxu0 0.0
        %524 = vmatpush1.msra.mxu0 0.0
        %525 = vmatprep.subr.mxu0 0.0
        %526 = vmatpush1.msra.mxu0 0.0
        %527 = vmatprep.mubr.f32.mxu0 0.0
        %528 = vmatmul.mubr.f32.gmra.mrb[0].mxu0 %v416
        %v529 = vpop.f32.mrb[0].mxu0
        %v530 = vadd.f32 0.0, %v529
        %v531 = vpop.f32.mrb[0].mxu0
        %v532 = vadd.f32 0.0, %v531
        %533 = vmatprep.mubr.f32.mxu0 0.0
        %534 = vmatmul.mubr.f32.gmra.mrb[0].mxu0 %v419
        %v535 = vpop.f32.mrb[0].mxu0
        %v536 = vadd.f32 0.0, %v535
        %v537 = vpop.f32.mrb[0].mxu0
        %v538 = vadd.f32 0.0, %v537
        %539 = vmatprep.mubr.f32.mxu0 0.0
        %540 = vmatmul.mubr.f32.gmra.mrb[0].mxu0 %v422
        %v541 = vpop.f32.mrb[0].mxu0
        %v542 = vadd.f32 0.0, %v541
        %v543 = vpop.f32.mrb[0].mxu0
        %v544 = vadd.f32 0.0, %v543
        %545 = vmatprep.mubr.f32.mxu0 0.0
        %546 = vmatmul.mubr.f32.gmra.mrb[0].mxu0 %v425
        %v547 = vpop.f32.mrb[0].mxu0
        %v548 = vadd.f32 0.0, %v547
        %v549 = vpop.f32.mrb[0].mxu0
        %v550 = vadd.f32 0.0, %v549
        %551 = vmatprep.mubr.f32.mxu0 0.0
        %552 = vmatmul.mubr.f32.gmra.mrb[0].mxu0 %v428
        %v553 = vpop.f32.mrb[0].mxu0
        %v554 = vadd.f32 0.0, %v553
        %v555 = vpop.f32.mrb[0].mxu0
        %v556 = vadd.f32 0.0, %v555
        %557 = vmatprep.mubr.f32.mxu0 0.0
        %558 = vmatmul.mubr.f32.gmra.mrb[0].mxu0 %v431
        %v559 = vpop.f32.mrb[0].mxu0
        %v560 = vadd.f32 0.0, %v559
        %v561 = vpop.f32.mrb[0].mxu0
        %v562 = vadd.f32 0.0, %v561
        %563 = vmatprep.mubr.f32.mxu0 0.0
        %564 = vmatmul.mubr.f32.gmra.mrb[0].mxu0 %v434
        %v565 = vpop.f32.mrb[0].mxu0
        %v566 = vadd.f32 0.0, %v565
        %v567 = vpop.f32.mrb[0].mxu0
        %v568 = vadd.f32 0.0, %v567
        %569 = vmatprep.mubr.f32.mxu0 0.0
        %570 = vmatmul.mubr.f32.gmra.mrb[0].mxu0 %v437
        %v571 = vpop.f32.mrb[0].mxu0
        %v572 = vadd.f32 0.0, %v571
        %v573 = vpop.f32.mrb[0].mxu0
        %v574 = vadd.f32 0.0, %v573
        %575 = vmatprep.mubr.f32.mxu0 0.0
        %576 = vmatmul.mubr.f32.gmra.mrb[0].mxu0 %v440
        %v577 = vpop.f32.mrb[0].mxu0
        %v578 = vadd.f32 0.0, %v577
        %v579 = vpop.f32.mrb[0].mxu0
        %v580 = vadd.f32 0.0, %v579
        %581 = vmatprep.mubr.f32.mxu0 0.0
        %582 = vmatmul.mubr.f32.gmra.mrb[0].mxu0 %v443
        %v583 = vpop.f32.mrb[0].mxu0
        %v584 = vadd.f32 0.0, %v583
        %v585 = vpop.f32.mrb[0].mxu0
        %v586 = vadd.f32 0.0, %v585
        %587 = vmatprep.mubr.f32.mxu0 0.0
        %588 = vmatmul.mubr.f32.gmra.mrb[0].mxu0 %v446
        %v589 = vpop.f32.mrb[0].mxu0
        %v590 = vadd.f32 0.0, %v589
        %v591 = vpop.f32.mrb[0].mxu0
        %v592 = vadd.f32 0.0, %v591
        %593 = vmatprep.mubr.f32.mxu0 0.0
        %594 = vmatmul.mubr.f32.gmra.mrb[0].mxu0 %v449
        %v595 = vpop.f32.mrb[0].mxu0
        %v596 = vadd.f32 0.0, %v595
        %v597 = vpop.f32.mrb[0].mxu0
        %v598 = vadd.f32 0.0, %v597
        %599 = vmatprep.mubr.f32.mxu0 0.0
        %600 = vmatmul.mubr.f32.gmra.mrb[0].mxu0 %v452
        %v601 = vpop.f32.mrb[0].mxu0
        %v602 = vadd.f32 0.0, %v601
        %v603 = vpop.f32.mrb[0].mxu0
        %v604 = vadd.f32 0.0, %v603
        %605 = vmatprep.mubr.f32.mxu0 0.0
        %606 = vmatmul.mubr.f32.gmra.mrb[0].mxu0 %v455
        %v607 = vpop.f32.mrb[0].mxu0
        %v608 = vadd.f32 0.0, %v607
        %v609 = vpop.f32.mrb[0].mxu0
        %v610 = vadd.f32 0.0, %v609
        %611 = vmatprep.mubr.f32.mxu0 0.0
        %612 = vmatmul.mubr.f32.gmra.mrb[0].mxu0 %v458
        %v613 = vpop.f32.mrb[0].mxu0
        %v614 = vadd.f32 0.0, %v613
        %v615 = vpop.f32.mrb[0].mxu0
        %v616 = vadd.f32 0.0, %v615
        %617 = vmatprep.mubr.f32.mxu0 0.0
        %618 = vmatmul.mubr.f32.gmra.mrb[0].mxu0 %v461
        %v619 = vpop.f32.mrb[0].mxu0
        %v620 = vadd.f32 0.0, %v619
        %v621 = vpop.f32.mrb[0].mxu0
        %v622 = vadd.f32 0.0, %v621
        %623 = vdwg.mxu0
        %v624 = vlaneseq
        %v625 = vshrl.u32 %v624, 7
        %v626 = vadd.s32 %v625, 8
        %v627 = vadd.s32 %v625, 16
        %v628 = vadd.s32 %v625, 24
        %v629 = vadd.s32 %v625, 32
        %v630 = vadd.s32 %v625, 40
        %v631 = vadd.s32 %v625, 48
        %v632 = vadd.s32 %v625, 56
        %v633 = vadd.s32 %v625, 64
        %v634 = vadd.s32 %v625, 72
        %v635 = vadd.s32 %v625, 80
        %v636 = vadd.s32 %v625, 88
        %v637 = vadd.s32 %v625, 96
        %v638 = vadd.s32 %v625, 104
        %v639 = vadd.s32 %v625, 112
        %v640 = vadd.s32 %v625, 120
        %v641 = vmax.f32 %v530, %v542
        %v642 = vmax.f32 %v536, %v548
        %v643 = vmax.f32 %v641, %v554
        %v644 = vmax.f32 %v642, %v560
        %v645 = vmax.f32 %v643, %v566
        %v646 = vmax.f32 %v644, %v572
        %v647 = vmax.f32 %v645, %v578
        %v648 = vmax.f32 %v646, %v584
        %v649 = vmax.f32 %v647, %v590
        %v650 = vmax.f32 %v648, %v596
        %v651 = vmax.f32 %v649, %v602
        %v652 = vmax.f32 %v650, %v608
        %v653 = vmax.f32 %v651, %v614
        %v654 = vmax.f32 %v652, %v620
        %v655 = vmax.f32 %v653, %v654
        %v656 = vrot.slane %v655, 4
        %v657 = vmax.f32 %v655, %v656
        %v658 = vrot.slane %v657, 2
        %v659 = vmax.f32 %v657, %v658
        %v660 = vrot.slane %v659, 1
        %v661 = vmax.f32 %v659, %v660
        %v662 = vmax.f32 %v532, %v544
        %v663 = vmax.f32 %v538, %v550
        %v664 = vmax.f32 %v662, %v556
        %v665 = vmax.f32 %v663, %v562
        %v666 = vmax.f32 %v664, %v568
        %v667 = vmax.f32 %v665, %v574
        %v668 = vmax.f32 %v666, %v580
        %v669 = vmax.f32 %v667, %v586
        %v670 = vmax.f32 %v668, %v592
        %v671 = vmax.f32 %v669, %v598
        %v672 = vmax.f32 %v670, %v604
        %v673 = vmax.f32 %v671, %v610
        %v674 = vmax.f32 %v672, %v616
        %v675 = vmax.f32 %v673, %v622
        %v676 = vmax.f32 %v674, %v675
        %v677 = vrot.slane %v676, 4
        %v678 = vmax.f32 %v676, %v677
        %v679 = vrot.slane %v678, 2
        %v680 = vmax.f32 %v678, %v679
        %v681 = vrot.slane %v680, 1
        %v682 = vmax.f32 %v680, %v681
        %vm683 = vcmp.eq.f32.partialorder %v530, %v661
        %vm684 = vcmp.eq.f32.partialorder %v532, %v682
        %vm685 = vcmp.eq.f32.partialorder %v536, %v661
        %vm686 = vcmp.eq.f32.partialorder %v538, %v682
        %vm687 = vcmp.eq.f32.partialorder %v542, %v661
        %vm688 = vcmp.eq.f32.partialorder %v544, %v682
        %vm689 = vcmp.eq.f32.partialorder %v548, %v661
        %vm690 = vcmp.eq.f32.partialorder %v550, %v682
        %vm691 = vcmp.eq.f32.partialorder %v554, %v661
        %vm692 = vcmp.eq.f32.partialorder %v556, %v682
        %vm693 = vcmp.eq.f32.partialorder %v560, %v661
        %vm694 = vcmp.eq.f32.partialorder %v562, %v682
        %vm695 = vcmp.eq.f32.partialorder %v566, %v661
        %vm696 = vcmp.eq.f32.partialorder %v568, %v682
        %vm697 = vcmp.eq.f32.partialorder %v572, %v661
        %vm698 = vcmp.eq.f32.partialorder %v574, %v682
        %vm699 = vcmp.eq.f32.partialorder %v578, %v661
        %vm700 = vcmp.eq.f32.partialorder %v580, %v682
        %vm701 = vcmp.eq.f32.partialorder %v584, %v661
        %vm702 = vcmp.eq.f32.partialorder %v586, %v682
        %vm703 = vcmp.eq.f32.partialorder %v590, %v661
        %vm704 = vcmp.eq.f32.partialorder %v592, %v682
        %vm705 = vcmp.eq.f32.partialorder %v596, %v661
        %vm706 = vcmp.eq.f32.partialorder %v598, %v682
        %vm707 = vcmp.eq.f32.partialorder %v602, %v661
        %vm708 = vcmp.eq.f32.partialorder %v604, %v682
        %vm709 = vcmp.eq.f32.partialorder %v608, %v661
        %vm710 = vcmp.eq.f32.partialorder %v610, %v682
        %vm711 = vcmp.eq.f32.partialorder %v614, %v661
        %vm712 = vcmp.eq.f32.partialorder %v616, %v682
        %vm713 = vcmp.eq.f32.partialorder %v620, %v661
        %vm714 = vcmp.eq.f32.partialorder %v622, %v682
        %v715 = vsel %vm683, %v625, 128
        %v716 = vsel %vm684, %v625, 128
        %v717 = vsel %vm685, %v626, 128
        %v718 = vsel %vm686, %v626, 128
        %v719 = vsel %vm687, %v627, 128
        %v720 = vsel %vm688, %v627, 128
        %v721 = vsel %vm689, %v628, 128
        %v722 = vsel %vm690, %v628, 128
        %v723 = vsel %vm691, %v629, 128
        %v724 = vsel %vm692, %v629, 128
        %v725 = vsel %vm693, %v630, 128
        %v726 = vsel %vm694, %v630, 128
        %v727 = vsel %vm695, %v631, 128
        %v728 = vsel %vm696, %v631, 128
        %v729 = vsel %vm697, %v632, 128
        %v730 = vsel %vm698, %v632, 128
        %v731 = vsel %vm699, %v633, 128
        %v732 = vsel %vm700, %v633, 128
        %v733 = vsel %vm701, %v634, 128
        %v734 = vsel %vm702, %v634, 128
        %v735 = vsel %vm703, %v635, 128
        %v736 = vsel %vm704, %v635, 128
        %v737 = vsel %vm705, %v636, 128
        %v738 = vsel %vm706, %v636, 128
        %v739 = vsel %vm707, %v637, 128
        %v740 = vsel %vm708, %v637, 128
        %v741 = vsel %vm709, %v638, 128
        %v742 = vsel %vm710, %v638, 128
        %v743 = vsel %vm711, %v639, 128
        %v744 = vsel %vm712, %v639, 128
        %v745 = vsel %vm713, %v640, 128
        %v746 = vsel %vm714, %v640, 128
        %vm747 = vcmp.lt.s32.totalorder %v715, %v719
        %v748 = vsel %vm747, %v715, %v719
        %vm749 = vcmp.lt.s32.totalorder %v717, %v721
        %v750 = vsel %vm749, %v717, %v721
        %vm751 = vcmp.lt.s32.totalorder %v748, %v723
        %v752 = vsel %vm751, %v748, %v723
        %vm753 = vcmp.lt.s32.totalorder %v750, %v725
        %v754 = vsel %vm753, %v750, %v725
        %vm755 = vcmp.lt.s32.totalorder %v752, %v727
        %v756 = vsel %vm755, %v752, %v727
        %vm757 = vcmp.lt.s32.totalorder %v754, %v729
        %v758 = vsel %vm757, %v754, %v729
        %vm759 = vcmp.lt.s32.totalorder %v756, %v731
        %v760 = vsel %vm759, %v756, %v731
        %vm761 = vcmp.lt.s32.totalorder %v758, %v733
        %v762 = vsel %vm761, %v758, %v733
        %vm763 = vcmp.lt.s32.totalorder %v760, %v735
        %v764 = vsel %vm763, %v760, %v735
        %vm765 = vcmp.lt.s32.totalorder %v762, %v737
        %v766 = vsel %vm765, %v762, %v737
        %vm767 = vcmp.lt.s32.totalorder %v764, %v739
        %v768 = vsel %vm767, %v764, %v739
        %vm769 = vcmp.lt.s32.totalorder %v766, %v741
        %v770 = vsel %vm769, %v766, %v741
        %vm771 = vcmp.lt.s32.totalorder %v768, %v743
        %v772 = vsel %vm771, %v768, %v743
        %vm773 = vcmp.lt.s32.totalorder %v770, %v745
        %v774 = vsel %vm773, %v770, %v745
        %vm775 = vcmp.lt.s32.totalorder %v772, %v774
        %v776 = vsel %vm775, %v772, %v774
        %v777 = vrot.slane %v776, 4
        %vm778 = vcmp.lt.s32.totalorder %v776, %v777
        %v779 = vsel %vm778, %v776, %v777
        %v780 = vrot.slane %v779, 2
        %vm781 = vcmp.lt.s32.totalorder %v779, %v780
        %v782 = vsel %vm781, %v779, %v780
        %v783 = vrot.slane %v782, 1
        %vm784 = vcmp.lt.s32.totalorder %v782, %v783
        %v785 = vsel %vm784, %v782, %v783
        %vm786 = vcmp.lt.s32.totalorder %v716, %v720
        %v787 = vsel %vm786, %v716, %v720
        %vm788 = vcmp.lt.s32.totalorder %v718, %v722
        %v789 = vsel %vm788, %v718, %v722
        %vm790 = vcmp.lt.s32.totalorder %v787, %v724
        %v791 = vsel %vm790, %v787, %v724
        %vm792 = vcmp.lt.s32.totalorder %v789, %v726
        %v793 = vsel %vm792, %v789, %v726
        %vm794 = vcmp.lt.s32.totalorder %v791, %v728
        %v795 = vsel %vm794, %v791, %v728
        %vm796 = vcmp.lt.s32.totalorder %v793, %v730
        %v797 = vsel %vm796, %v793, %v730
        %vm798 = vcmp.lt.s32.totalorder %v795, %v732
        %v799 = vsel %vm798, %v795, %v732
        %vm800 = vcmp.lt.s32.totalorder %v797, %v734
        %v801 = vsel %vm800, %v797, %v734
        %vm802 = vcmp.lt.s32.totalorder %v799, %v736
        %v803 = vsel %vm802, %v799, %v736
        %vm804 = vcmp.lt.s32.totalorder %v801, %v738
        %v805 = vsel %vm804, %v801, %v738
        %vm806 = vcmp.lt.s32.totalorder %v803, %v740
        %v807 = vsel %vm806, %v803, %v740
        %vm808 = vcmp.lt.s32.totalorder %v805, %v742
        %v809 = vsel %vm808, %v805, %v742
        %vm810 = vcmp.lt.s32.totalorder %v807, %v744
        %v811 = vsel %vm810, %v807, %v744
        %vm812 = vcmp.lt.s32.totalorder %v809, %v746
        %v813 = vsel %vm812, %v809, %v746
        %vm814 = vcmp.lt.s32.totalorder %v811, %v813
        %v815 = vsel %vm814, %v811, %v813
        %v816 = vrot.slane %v815, 4
        %vm817 = vcmp.lt.s32.totalorder %v815, %v816
        %v818 = vsel %vm817, %v815, %v816
        %v819 = vrot.slane %v818, 2
        %vm820 = vcmp.lt.s32.totalorder %v818, %v819
        %v821 = vsel %vm820, %v818, %v819
        %v822 = vrot.slane %v821, 1
        %vm823 = vcmp.lt.s32.totalorder %v821, %v822
        %v824 = vsel %vm823, %v821, %v822
        %vm825 = vcmp.eq.s32.totalorder %v625, %v785
        %vm826 = vcmp.eq.s32.totalorder %v625, %v824
        %vm827 = vcmp.eq.s32.totalorder %v626, %v785
        %vm828 = vcmp.eq.s32.totalorder %v626, %v824
        %vm829 = vcmp.eq.s32.totalorder %v627, %v785
        %vm830 = vcmp.eq.s32.totalorder %v627, %v824
        %vm831 = vcmp.eq.s32.totalorder %v628, %v785
        %vm832 = vcmp.eq.s32.totalorder %v628, %v824
        %vm833 = vcmp.eq.s32.totalorder %v629, %v785
        %vm834 = vcmp.eq.s32.totalorder %v629, %v824
        %vm835 = vcmp.eq.s32.totalorder %v630, %v785
        %vm836 = vcmp.eq.s32.totalorder %v630, %v824
        %vm837 = vcmp.eq.s32.totalorder %v631, %v785
        %vm838 = vcmp.eq.s32.totalorder %v631, %v824
        %vm839 = vcmp.eq.s32.totalorder %v632, %v785
        %vm840 = vcmp.eq.s32.totalorder %v632, %v824
        %vm841 = vcmp.eq.s32.totalorder %v633, %v785
        %vm842 = vcmp.eq.s32.totalorder %v633, %v824
        %vm843 = vcmp.eq.s32.totalorder %v634, %v785
        %vm844 = vcmp.eq.s32.totalorder %v634, %v824
        %vm845 = vcmp.eq.s32.totalorder %v635, %v785
        %vm846 = vcmp.eq.s32.totalorder %v635, %v824
        %vm847 = vcmp.eq.s32.totalorder %v636, %v785
        %vm848 = vcmp.eq.s32.totalorder %v636, %v824
        %vm849 = vcmp.eq.s32.totalorder %v637, %v785
        %vm850 = vcmp.eq.s32.totalorder %v637, %v824
        %vm851 = vcmp.eq.s32.totalorder %v638, %v785
        %vm852 = vcmp.eq.s32.totalorder %v638, %v824
        %vm853 = vcmp.eq.s32.totalorder %v639, %v785
        %vm854 = vcmp.eq.s32.totalorder %v639, %v824
        %vm855 = vcmp.eq.s32.totalorder %v640, %v785
        %vm856 = vcmp.eq.s32.totalorder %v640, %v824
        %v857 = vsel %vm825, 1, 0
        %v858 = vsel %vm826, 1, 0
        %v859 = vsel %vm827, 1, 0
        %v860 = vsel %vm828, 1, 0
        %v861 = vsel %vm829, 1, 0
        %v862 = vsel %vm830, 1, 0
        %v863 = vsel %vm831, 1, 0
        %v864 = vsel %vm832, 1, 0
        %v865 = vsel %vm833, 1, 0
        %v866 = vsel %vm834, 1, 0
        %v867 = vsel %vm835, 1, 0
        %v868 = vsel %vm836, 1, 0
        %v869 = vsel %vm837, 1, 0
        %v870 = vsel %vm838, 1, 0
        %v871 = vsel %vm839, 1, 0
        %v872 = vsel %vm840, 1, 0
        %v873 = vsel %vm841, 1, 0
        %v874 = vsel %vm842, 1, 0
        %v875 = vsel %vm843, 1, 0
        %v876 = vsel %vm844, 1, 0
        %v877 = vsel %vm845, 1, 0
        %v878 = vsel %vm846, 1, 0
        %v879 = vsel %vm847, 1, 0
        %v880 = vsel %vm848, 1, 0
        %v881 = vsel %vm849, 1, 0
        %v882 = vsel %vm850, 1, 0
        %v883 = vsel %vm851, 1, 0
        %v884 = vsel %vm852, 1, 0
        %v885 = vsel %vm853, 1, 0
        %v886 = vsel %vm854, 1, 0
        %v887 = vsel %vm855, 1, 0
        %v888 = vsel %vm856, 1, 0
        %v889 = vcvt.s32.f32 %v857
        %v890 = vcvt.s32.f32 %v858
        %v891 = vcvt.s32.f32 %v859
        %v892 = vcvt.s32.f32 %v860
        %v893 = vcvt.s32.f32 %v861
        %v894 = vcvt.s32.f32 %v862
        %v895 = vcvt.s32.f32 %v863
        %v896 = vcvt.s32.f32 %v864
        %v897 = vcvt.s32.f32 %v865
        %v898 = vcvt.s32.f32 %v866
        %v899 = vcvt.s32.f32 %v867
        %v900 = vcvt.s32.f32 %v868
        %v901 = vcvt.s32.f32 %v869
        %v902 = vcvt.s32.f32 %v870
        %v903 = vcvt.s32.f32 %v871
        %v904 = vcvt.s32.f32 %v872
        %v905 = vcvt.s32.f32 %v873
        %v906 = vcvt.s32.f32 %v874
        %v907 = vcvt.s32.f32 %v875
        %v908 = vcvt.s32.f32 %v876
        %v909 = vcvt.s32.f32 %v877
        %v910 = vcvt.s32.f32 %v878
        %v911 = vcvt.s32.f32 %v879
        %v912 = vcvt.s32.f32 %v880
        %v913 = vcvt.s32.f32 %v881
        %v914 = vcvt.s32.f32 %v882
        %v915 = vcvt.s32.f32 %v883
        %v916 = vcvt.s32.f32 %v884
        %v917 = vcvt.s32.f32 %v885
        %v918 = vcvt.s32.f32 %v886
        %v919 = vcvt.s32.f32 %v887
        %v920 = vcvt.s32.f32 %v888
        %v921 = vld [vmem:[#allocation7] sm:$0xff]
        %v922 = vld [vmem:[#allocation7 + $0x8] sm:$0xff]
        %v923 = vld [vmem:[#allocation7 + $0x10] sm:$0xff]
        %v924 = vld [vmem:[#allocation7 + $0x18] sm:$0xff]
        %925 = vmatprep.subr.mxu0 %v890
        %926 = vmatpush1.msra.mxu0 %v889
        %927 = vmatprep.subr.mxu0 %v892
        %928 = vmatpush1.msra.mxu0 %v891
        %929 = vmatprep.subr.mxu0 %v894
        %930 = vmatpush1.msra.mxu0 %v893
        %931 = vmatprep.subr.mxu0 %v896
        %932 = vmatpush1.msra.mxu0 %v895
        %933 = vmatprep.subr.mxu0 %v898
        %934 = vmatpush1.msra.mxu0 %v897
        %935 = vmatprep.subr.mxu0 %v900
        %936 = vmatpush1.msra.mxu0 %v899
        %937 = vmatprep.subr.mxu0 %v902
        %938 = vmatpush1.msra.mxu0 %v901
        %939 = vmatprep.subr.mxu0 %v904
        %940 = vmatpush1.msra.mxu0 %v903
        %941 = vmatprep.subr.mxu0 %v906
        %942 = vmatpush1.msra.mxu0 %v905
        %943 = vmatprep.subr.mxu0 %v908
        %944 = vmatpush1.msra.mxu0 %v907
        %945 = vmatprep.subr.mxu0 %v910
        %946 = vmatpush1.msra.mxu0 %v909
        %947 = vmatprep.subr.mxu0 %v912
        %948 = vmatpush1.msra.mxu0 %v911
        %949 = vmatprep.subr.mxu0 %v914
        %950 = vmatpush1.msra.mxu0 %v913
        %951 = vmatprep.subr.mxu0 %v916
        %952 = vmatpush1.msra.mxu0 %v915
        %953 = vmatprep.subr.mxu0 %v918
        %954 = vmatpush1.msra.mxu0 %v917
        %955 = vmatprep.subr.mxu0 %v920
        %956 = vmatpush1.msra.mxu0 %v919
        %957 = vmatprep.subr.mxu0 0.0
        %958 = vmatpush1.msra.mxu0 0.0
        %959 = vmatprep.subr.mxu0 0.0
        %960 = vmatpush1.msra.mxu0 0.0
        %961 = vmatprep.subr.mxu0 0.0
        %962 = vmatpush1.msra.mxu0 0.0
        %963 = vmatprep.subr.mxu0 0.0
        %964 = vmatpush1.msra.mxu0 0.0
        %965 = vmatprep.subr.mxu0 0.0
        %966 = vmatpush1.msra.mxu0 0.0
        %967 = vmatprep.subr.mxu0 0.0
        %968 = vmatpush1.msra.mxu0 0.0
        %969 = vmatprep.subr.mxu0 0.0
        %970 = vmatpush1.msra.mxu0 0.0
        %971 = vmatprep.subr.mxu0 0.0
        %972 = vmatpush1.msra.mxu0 0.0
        %973 = vmatprep.subr.mxu0 0.0
        %974 = vmatpush1.msra.mxu0 0.0
        %975 = vmatprep.subr.mxu0 0.0
        %976 = vmatpush1.msra.mxu0 0.0
        %977 = vmatprep.subr.mxu0 0.0
        %978 = vmatpush1.msra.mxu0 0.0
        %979 = vmatprep.subr.mxu0 0.0
        %980 = vmatpush1.msra.mxu0 0.0
        %981 = vmatprep.subr.mxu0 0.0
        %982 = vmatpush1.msra.mxu0 0.0
        %983 = vmatprep.subr.mxu0 0.0
        %984 = vmatpush1.msra.mxu0 0.0
        %985 = vmatprep.subr.mxu0 0.0
        %986 = vmatpush1.msra.mxu0 0.0
        %987 = vmatprep.subr.mxu0 0.0
        %988 = vmatpush1.msra.mxu0 0.0
        %989 = vmatprep.mubr.f32.mxu0 0.0
        %990 = vmatmul.mubr.f32.gmra.mrb[0].mxu0 %v921
        %v991 = vpop.f32.mrb[0].mxu0
        %v992 = vadd.f32 0.0, %v991
        %v993 = vpop.f32.mrb[0].mxu0
        %v994 = vadd.f32 0.0, %v993
        %995 = vmatprep.mubr.f32.mxu0 0.0
        %996 = vmatmul.mubr.f32.gmra.mrb[0].mxu0 %v922
        %v997 = vpop.f32.mrb[0].mxu0
        %v998 = vadd.f32 0.0, %v997
        %v999 = vpop.f32.mrb[0].mxu0
        %v1000 = vadd.f32 0.0, %v999
        %1001 = vmatprep.mubr.f32.mxu0 0.0
        %1002 = vmatmul.mubr.f32.gmra.mrb[0].mxu0 %v923
        %v1003 = vpop.f32.mrb[0].mxu0
        %v1004 = vadd.f32 0.0, %v1003
        %v1005 = vpop.f32.mrb[0].mxu0
        %v1006 = vadd.f32 0.0, %v1005
        %1007 = vmatprep.mubr.f32.mxu0 0.0
        %1008 = vmatmul.mubr.f32.gmra.mrb[0].mxu0 %v924
        %v1009 = vpop.f32.mrb[0].mxu0
        %v1010 = vadd.f32 0.0, %v1009
        %v1011 = vpop.f32.mrb[0].mxu0
        %v1012 = vadd.f32 0.0, %v1011
        %1013 = vdwg.mxu0
        %1014 = vst [vmem:[%s281] sm:$0xff] %v992
        %1015 = vst [vmem:[%s281 + $0x8] sm:$0xff] %v994
        %1016 = vst [vmem:[%s281 + $0x10] sm:$0xff] %v998
        %1017 = vst [vmem:[%s281 + $0x18] sm:$0xff] %v1000
        %1018 = vst [vmem:[%s281 + $0x20] sm:$0xff] %v1004
        %1019 = vst [vmem:[%s281 + $0x28] sm:$0xff] %v1006
        %1020 = vst [vmem:[%s281 + $0x30] sm:$0xff] %v1010
        %1021 = vst [vmem:[%s281 + $0x38] sm:$0xff] %v1012
        %v1022 = vcombine.low %v785, %v824
        %v1024 = vunpack.c.l.s4 1966171168
        %v1025 = vunpack.c.0.s8 %v1024
        %v1026 = vlaneseq
        %v1027 = vshrl.u32 %v1026, 7
        %v1028 = vsub.s32 %v1025, %v1027
        %v1029 = vrot.slane %v1022, %v1028
        %v1031 = vunpack.c.l.s4 1966171168
        %v1032 = vunpack.c.0.s8 %v1031
        %v1033 = vlaneseq
        %v1034 = vshrl.u32 %v1033, 7
        %v1035 = vsub.s32 %v1032, %v1034
        %v1036 = vrot.slane %v1029, %v1035
        %v1037 = vlaneseq
        %vm1038 = vcmp.ge.s32.totalorder %v1037, 0
        %vm1039 = vcmp.lt.s32.totalorder %v1037, 256
        %vm1040 = vmand %vm1038, %vm1039
        %1041 = vst.msk [vmem:[%s288] sm:$0x3] %vm1040, %v1036
        %v1042 = vld [vmem:[%s310] sm:$0xff]
        %v1043 = vld [vmem:[%s310 + $0x8] sm:$0xff]
        %v1044 = vld [vmem:[%s310 + $0x10] sm:$0xff]
        %v1045 = vld [vmem:[%s310 + $0x18] sm:$0xff]
        %v1046 = vld [vmem:[%s310 + $0x20] sm:$0xff]
        %v1047 = vld [vmem:[%s310 + $0x28] sm:$0xff]
        %v1048 = vld [vmem:[%s310 + $0x30] sm:$0xff]
        %v1049 = vld [vmem:[%s310 + $0x38] sm:$0xff]
        %v1050 = vld [vmem:[%s310 + $0x40] sm:$0xff]
        %v1051 = vld [vmem:[%s310 + $0x48] sm:$0xff]
        %v1052 = vld [vmem:[%s310 + $0x50] sm:$0xff]
        %v1053 = vld [vmem:[%s310 + $0x58] sm:$0xff]
        %v1054 = vld [vmem:[%s310 + $0x60] sm:$0xff]
        %v1055 = vld [vmem:[%s310 + $0x68] sm:$0xff]
        %v1056 = vld [vmem:[%s310 + $0x70] sm:$0xff]
        %v1057 = vld [vmem:[%s310 + $0x78] sm:$0xff]
        %v1058 = vadd.f32 %v889, %v890
        %1059 = vadd.xlane.f32.xlu0 %v1058
        %v1060 = vpop.xlane.xlu0 %1059
        %v1061 = vadd.f32 %v891, %v892
        %1062 = vadd.xlane.f32.xlu0 %v1061
        %v1063 = vpop.xlane.xlu0 %1062
        %v1064 = vadd.f32 %v893, %v894
        %1065 = vadd.xlane.f32.xlu0 %v1064
        %v1066 = vpop.xlane.xlu0 %1065
        %v1067 = vadd.f32 %v895, %v896
        %1068 = vadd.xlane.f32.xlu0 %v1067
        %v1069 = vpop.xlane.xlu0 %1068
        %v1070 = vadd.f32 %v897, %v898
        %1071 = vadd.xlane.f32.xlu0 %v1070
        %v1072 = vpop.xlane.xlu0 %1071
        %v1073 = vadd.f32 %v899, %v900
        %1074 = vadd.xlane.f32.xlu0 %v1073
        %v1075 = vpop.xlane.xlu0 %1074
        %v1076 = vadd.f32 %v901, %v902
        %1077 = vadd.xlane.f32.xlu0 %v1076
        %v1078 = vpop.xlane.xlu0 %1077
        %v1079 = vadd.f32 %v903, %v904
        %1080 = vadd.xlane.f32.xlu0 %v1079
        %v1081 = vpop.xlane.xlu0 %1080
        %v1082 = vadd.f32 %v905, %v906
        %1083 = vadd.xlane.f32.xlu0 %v1082
        %v1084 = vpop.xlane.xlu0 %1083
        %v1085 = vadd.f32 %v907, %v908
        %1086 = vadd.xlane.f32.xlu0 %v1085
        %v1087 = vpop.xlane.xlu0 %1086
        %v1088 = vadd.f32 %v909, %v910
        %1089 = vadd.xlane.f32.xlu0 %v1088
        %v1090 = vpop.xlane.xlu0 %1089
        %v1091 = vadd.f32 %v911, %v912
        %1092 = vadd.xlane.f32.xlu0 %v1091
        %v1093 = vpop.xlane.xlu0 %1092
        %v1094 = vadd.f32 %v913, %v914
        %1095 = vadd.xlane.f32.xlu0 %v1094
        %v1096 = vpop.xlane.xlu0 %1095
        %v1097 = vadd.f32 %v915, %v916
        %1098 = vadd.xlane.f32.xlu0 %v1097
        %v1099 = vpop.xlane.xlu0 %1098
        %v1100 = vadd.f32 %v917, %v918
        %1101 = vadd.xlane.f32.xlu0 %v1100
        %v1102 = vpop.xlane.xlu0 %1101
        %v1103 = vadd.f32 %v919, %v920
        %1104 = vadd.xlane.f32.xlu0 %v1103
        %v1105 = vpop.xlane.xlu0 %1104
        %v1106 = vadd.f32 %v1042, %v1060
        %v1107 = vadd.f32 %v1043, %v1063
        %v1108 = vadd.f32 %v1044, %v1066
        %v1109 = vadd.f32 %v1045, %v1069
        %v1110 = vadd.f32 %v1046, %v1072
        %v1111 = vadd.f32 %v1047, %v1075
        %v1112 = vadd.f32 %v1048, %v1078
        %v1113 = vadd.f32 %v1049, %v1081
        %v1114 = vadd.f32 %v1050, %v1084
        %v1115 = vadd.f32 %v1051, %v1087
        %v1116 = vadd.f32 %v1052, %v1090
        %v1117 = vadd.f32 %v1053, %v1093
        %v1118 = vadd.f32 %v1054, %v1096
        %v1119 = vadd.f32 %v1055, %v1099
        %v1120 = vadd.f32 %v1056, %v1102
        %v1121 = vadd.f32 %v1057, %v1105
        %vm1122 = vcmask 7168
        %1123 = vst.msk [vmem:[%s310] sm:$0xff] %vm1122, %v1106
        %1124 = vst.msk [vmem:[%s310 + $0x8] sm:$0xff] %vm1122, %v1107
        %1125 = vst.msk [vmem:[%s310 + $0x10] sm:$0xff] %vm1122, %v1108
        %1126 = vst.msk [vmem:[%s310 + $0x18] sm:$0xff] %vm1122, %v1109
        %1127 = vst.msk [vmem:[%s310 + $0x20] sm:$0xff] %vm1122, %v1110
        %1128 = vst.msk [vmem:[%s310 + $0x28] sm:$0xff] %vm1122, %v1111
        %1129 = vst.msk [vmem:[%s310 + $0x30] sm:$0xff] %vm1122, %v1112
        %1130 = vst.msk [vmem:[%s310 + $0x38] sm:$0xff] %vm1122, %v1113
        %1131 = vst.msk [vmem:[%s310 + $0x40] sm:$0xff] %vm1122, %v1114
        %1132 = vst.msk [vmem:[%s310 + $0x48] sm:$0xff] %vm1122, %v1115
        %1133 = vst.msk [vmem:[%s310 + $0x50] sm:$0xff] %vm1122, %v1116
        %1134 = vst.msk [vmem:[%s310 + $0x58] sm:$0xff] %vm1122, %v1117
        %1135 = vst.msk [vmem:[%s310 + $0x60] sm:$0xff] %vm1122, %v1118
        %1136 = vst.msk [vmem:[%s310 + $0x68] sm:$0xff] %vm1122, %v1119
        %1137 = vst.msk [vmem:[%s310 + $0x70] sm:$0xff] %vm1122, %v1120
        %1138 = vst.msk [vmem:[%s310 + $0x78] sm:$0xff] %vm1122, %v1121
        %v1139 = vsub.f32 %v370, %v992
        %v1140 = vsub.f32 %v371, %v994
        %v1141 = vsub.f32 %v372, %v998
        %v1142 = vsub.f32 %v373, %v1000
        %v1143 = vsub.f32 %v374, %v1004
        %v1144 = vsub.f32 %v375, %v1006
        %v1145 = vsub.f32 %v376, %v1010
        %v1146 = vsub.f32 %v377, %v1012
        %v1147 = vmul.f32 %v1139, %v1139
        %v1148 = vmul.f32 %v1140, %v1140
        %v1149 = vmul.f32 %v1141, %v1141
        %v1150 = vmul.f32 %v1142, %v1142
        %v1151 = vmul.f32 %v1143, %v1143
        %v1152 = vmul.f32 %v1144, %v1144
        %v1153 = vmul.f32 %v1145, %v1145
        %v1154 = vmul.f32 %v1146, %v1146
        %v1155 = vadd.f32 %v1147, %v1148
        %v1156 = vadd.f32 %v1149, %v1150
        %v1157 = vadd.f32 %v1151, %v1152
        %v1158 = vadd.f32 %v1153, %v1154
        %v1159 = vld [vmem:[%s302] sm:$0xff]
        %v1160 = vld [vmem:[%s302 + $0x8] sm:$0xff]
        %v1161 = vld [vmem:[%s302 + $0x10] sm:$0xff]
        %v1162 = vld [vmem:[%s302 + $0x18] sm:$0xff]
        %v1163 = vadd.f32 %v1159, %v1155
        %v1164 = vadd.f32 %v1160, %v1156
        %v1165 = vadd.f32 %v1161, %v1157
        %v1166 = vadd.f32 %v1162, %v1158
        %1167 = vst [vmem:[%s302] sm:$0xff] %v1163
        %1168 = vst [vmem:[%s302 + $0x8] sm:$0xff] %v1164
        %1169 = vst [vmem:[%s302 + $0x10] sm:$0xff] %v1165
        %1170 = vst [vmem:[%s302 + $0x18] sm:$0xff] %v1166
        %s1171 = sand.u32 %s98, 1
        %s1172 = scalar_lea.sflag [#allocation6], %s1171
        %s1173 = sand.u32 %s98, 1
        %s1174 = smul.addr %s1173, 64
        %s1175 = scalar_lea.vmem [#allocation9], %s1174
        %s1176 = sand.u32 %s27, 1
        %s1177 = scalar_lea.sflag [#allocation11], %s1176
        %s1178 = sand.u32 %s126, 1
        %s1179 = smul.addr %s1178, 2
        %s1180 = scalar_lea.vmem [#allocation10], %s1179
        %p1181 = scmp.lt.s32.totalorder %s31, 1
        %s1182 = scalar_select %p1181, %s31, 1
        %s1183 = smul.addr %s1182, 16
        %s1184 = smul.addr %s1183, 8
        %s1185 = scalar_lea.vmem %s4, %s1184
        %s1186 = sand.u32 %s27, 1
        %s1187 = scalar_lea.sflag [#allocation11], %s1186
        %s1188 = sand.u32 %s178, 1
        %s1189 = smul.addr %s1188, 32
        %s1190 = scalar_lea.vmem [#allocation12], %s1189
        // Predicated region
        $region41: #{tpu_custom_call.1} parent=27 // pred_check
          %p1191 = pneg %p108
        $region42: #{tpu_custom_call.1} parent=27 // pred_check_branch
          %1193 = sbr.rel (%p1191) target = $region44
        $region43: #{tpu_custom_call.1} parent=27 // pred_region
          %s1194 = smul.u32 2, %s32
          %s1196 = ssub.s32 1024, 1024
          %1197 = vsyncadd %s1172, %s1196
          %s1198 = smul.addr %s31, 8
          %s1199 = sadd.s32 %s1194, %s1198
          %s1200 = smul.addr %s1199, 128
          %s1201 = scalar_lea.hbm %s2, %s1200
          %s1202 = sshll.u32 %s1175, 4
          %s1203 = int_to_ptr.vmem [resolvable:$true] %s1202
          %1208 = dma.vmem_to_hbm [thread:$0]  %s1203, 1024, %s1201, %s1172, 256, 256, 16
        $region44: #{tpu_custom_call.1} parent=27 // pred_fallthru
          _
        // Predicated region
        $region45: #{tpu_custom_call.1} parent=27 // pred_check
          %p1209 = pneg %p136
        $region46: #{tpu_custom_call.1} parent=27 // pred_check_branch
          %1211 = sbr.rel (%p1209) target = $region48
        $region47: #{tpu_custom_call.1} parent=27 // pred_region
          %s1212 = smul.u32 2, %s32
          %s1214 = ssub.s32 32, 32
          %1215 = vsyncadd %s1177, %s1214
          %s1216 = smul.addr %s31, 2
          %s1217 = sadd.s32 %s1212, %s1216
          %s1218 = smul.addr %s1217, 16
          %s1219 = scalar_lea.hbm %s3, %s1218
          %s1221 = sshll.u32 %s1180, 4
          %s1222 = int_to_ptr.vmem [resolvable:$true] %s1221
          %1224 = dma.vmem_to_hbm [thread:$0]  %s1222, 32, %s1219, %s1177
        $region48: #{tpu_custom_call.1} parent=27 // pred_fallthru
          _
        // Predicated region
        $region49: #{tpu_custom_call.1} parent=27 // pred_check
          %p1225 = pneg %p162
        $region50: #{tpu_custom_call.1} parent=27 // pred_check_branch
          %1227 = sbr.rel (%p1225) target = $region52
        $region51: #{tpu_custom_call.1} parent=27 // pred_region
          _
        $region52: #{tpu_custom_call.1} parent=27 // pred_fallthru
          _
        // Predicated region
        $region53: #{tpu_custom_call.1} parent=27 // pred_check
          %p1228 = pneg %p188
        $region54: #{tpu_custom_call.1} parent=27 // pred_check_branch
          %1230 = sbr.rel (%p1228) target = $region56
        $region55: #{tpu_custom_call.1} parent=27 // pred_region
          %s1232 = ssub.s32 512, 512
          %1233 = vsyncadd %s1187, %s1232
          %s1234 = smul.addr %s31, 4
          %s1235 = smul.addr %s1234, 128
          %s1236 = scalar_lea.hbm %s5, %s1235
          %s1237 = sshll.u32 %s1190, 4
          %s1238 = int_to_ptr.vmem [resolvable:$true] %s1237
          %1243 = dma.vmem_to_hbm [thread:$0]  %s1238, 512, %s1236, %s1187, 128, 128, 8
        $region56: #{tpu_custom_call.1} parent=27 // pred_fallthru
          _
      $region28: #{tpu_custom_call.1} parent=5 // pred_fallthru
        _
      %p1244 = scmp.le.s32.totalorder 2, %s22
      // Predicated region
      $region57: #{tpu_custom_call.1} parent=5 // pred_check
        %p1245 = pneg %p1244
      $region58: #{tpu_custom_call.1} parent=5 // pred_check_branch
        %1247 = sbr.rel (%p1245) target = $region60
      $region59: #{tpu_custom_call.1} parent=5 // pred_region
        %s1248 = ssub.s32 %s22, 2
        // Predicated region
        $region61: #{tpu_custom_call.1} parent=59 // pred_check
          %p1249 = pneg %p114
        $region62: #{tpu_custom_call.1} parent=59 // pred_check_branch
          %1251 = sbr.rel (%p1249) target = $region64
        $region63: #{tpu_custom_call.1} parent=59 // pred_region
          %s1252 = sand.u32 %s99, 1
          %s1253 = scalar_lea.sflag [#allocation6], %s1252
          %s1254 = sand.u32 %s99, 1
          %s1255 = smul.addr %s1254, 64
          %s1256 = scalar_lea.vmem [#allocation9], %s1255
          %1257 = dma.done %s1253, 1024
        $region64: #{tpu_custom_call.1} parent=59 // pred_fallthru
          _
        // Predicated region
        $region65: #{tpu_custom_call.1} parent=59 // pred_check
          %p1258 = pneg %p142
        $region66: #{tpu_custom_call.1} parent=59 // pred_check_branch
          %1260 = sbr.rel (%p1258) target = $region68
        $region67: #{tpu_custom_call.1} parent=59 // pred_region
          %s1261 = sand.u32 %s28, 1
          %s1262 = scalar_lea.sflag [#allocation11], %s1261
          %s1263 = sand.u32 %s127, 1
          %s1264 = smul.addr %s1263, 2
          %s1265 = scalar_lea.vmem [#allocation10], %s1264
          %1266 = dma.done %s1262, 32
        $region68: #{tpu_custom_call.1} parent=59 // pred_fallthru
          _
        // Predicated region
        $region69: #{tpu_custom_call.1} parent=59 // pred_check
          %p1267 = pneg %p168
        $region70: #{tpu_custom_call.1} parent=59 // pred_check_branch
          %1269 = sbr.rel (%p1267) target = $region72
        $region71: #{tpu_custom_call.1} parent=59 // pred_region
          %p1270 = scmp.lt.s32.totalorder %s33, 1
          %s1271 = scalar_select %p1270, %s33, 1
          %s1272 = smul.addr %s1271, 16
          %s1273 = smul.addr %s1272, 8
          %s1274 = scalar_lea.vmem %s4, %s1273
        $region72: #{tpu_custom_call.1} parent=59 // pred_fallthru
          _
        // Predicated region
        $region73: #{tpu_custom_call.1} parent=59 // pred_check
          %p1275 = pneg %p194
        $region74: #{tpu_custom_call.1} parent=59 // pred_check_branch
          %1277 = sbr.rel (%p1275) target = $region76
        $region75: #{tpu_custom_call.1} parent=59 // pred_region
          %s1278 = sand.u32 %s28, 1
          %s1279 = scalar_lea.sflag [#allocation11], %s1278
          %s1280 = sand.u32 %s179, 1
          %s1281 = smul.addr %s1280, 32
          %s1282 = scalar_lea.vmem [#allocation12], %s1281
          %1283 = dma.done %s1279, 512
        $region76: #{tpu_custom_call.1} parent=59 // pred_fallthru
          _
      $region60: #{tpu_custom_call.1} parent=5 // pred_fallthru
        _
    $region6: #{tpu_custom_call.1} parent=1 // loop_footer
      %s26 = sadd.s32 1, %s22
    $region7: #{tpu_custom_call.1} parent=1 // loop_footer_branch
      %21 = sbr.rel target = $region3
    $region8: #{tpu_custom_call.1} parent=1 // loop_exit
      _
    %1284 = vsyncpa [#allocation5], 1
    %s1285 = scalar_lea.sflag [#allocation5], 1
    %1286 = vsyncpa %s1285, 1
    %1287 = vsyncpa [#allocation8], 1
    %1288 = vsyncpa [#allocation6], 1
    %s1289 = scalar_lea.sflag [#allocation6], 1
    %1290 = vsyncpa %s1289, 1
    %1291 = vsyncpa [#allocation11], 1
    %s1292 = scalar_lea.sflag [#allocation11], 1
    %1293 = vsyncpa %s1292, 1

</llo_original>
